<compile_context>
chip_gen: v7x
topology: tpu7x:2x2x1
jax: 0.10.0
libtpu: 0.0.40
codegen_flags: <defaults>
</compile_context>

<pallas_src>
import functools

import jax
import jax.numpy as jnp
from jax import lax
from jax.experimental import pallas as pl
from jax.experimental.pallas import tpu as pltpu


# ----------------------------------------------------------------------------
# Fused encoder (BiLSTM) + decoder (relation attention + tagger MLP) kernel.
# One grid step processes a block of BB sequences end-to-end in VMEM.
# ----------------------------------------------------------------------------
def _rel_labeling_kernel(x_ref,      # (T, BB, D)    bf16, time-major embeddings
                         mask_ref,   # (T, BB, 1)    f32 validity mask
                         rel_ref,    # (BB, R)       bf16 relation embedding
                         wih_ref,    # (D, 8H)       bf16 dense input projection
                         whh_ref,    # (2H, 8H)      bf16 block-diag recurrent
                         bg_ref,     # (1, 8H)       f32 gate biases (both dirs)
                         whc_ref,    # (2H, A+K)     bf16 fused [att_wh | w1_h]
                         wr_ref,     # (R, A)        bf16 attention (relation)
                         v_ref,      # (1, A)        f32 attention score vector
                         w1r_ref,    # (R, K)        bf16 tagger MLP, relation
                         w1c_ref,    # (2H, K)       bf16 tagger MLP, context
                         b1_ref,     # (1, K)        f32
                         w2_ref,     # (K, TAGP)     bf16 padded output proj
                         b2_ref,     # (1, TAGP)     f32
                         out_ref,    # (T, BB, TAGP) f32
                         gx_ref,     # scratch (T, BB, 8H) f32 gate pre-acts
                         henc_ref):  # scratch (T, BB, 2H) f32 encoder states
    T, B, D = x_ref.shape
    G = gx_ref.shape[-1]            # 8H
    H2 = henc_ref.shape[-1]         # 2H
    H = H2 // 2
    A = wr_ref.shape[-1]
    K = w1c_ref.shape[-1]
    TAGP = out_ref.shape[-1]
    f32 = jnp.float32
    bf16 = jnp.bfloat16

    # ---- 1. Input projection: one dense bf16 MXU matmul over all T*B rows.
    #      Gate column layout: [i_f i_b | f_f f_b | o_f o_b | g_f g_b].
    x2d = x_ref[...].reshape(T * B, D)                              # bf16
    gall = jnp.dot(x2d, wih_ref[...], preferred_element_type=f32)   # (T*B, 8H)
    gx_ref[...] = gall.reshape(T, B, G) + bg_ref[...][None, :, :]

    whh = whh_ref[...]                                              # (2H,8H) bf16

    # Hoisted lane selects (computed once, reused by every unrolled step).
    lane_g = lax.broadcasted_iota(jnp.int32, (B, G), 1)
    fwd_sel_g = (lane_g % H2) < H          # True on forward-direction gate lanes
    lane_h = lax.broadcasted_iota(jnp.int32, (B, H2), 1)
    fwd_sel_h = lane_h < H                 # True on forward-direction state lanes

    # ---- 2. Fused fwd+bwd LSTM recurrence.
    #  At step s the forward dir consumes token s and the backward dir token
    #  T-1-s; gates for both are assembled with a single lane-select, so each
    #  step costs one (B,2H)x(2H,8H) MXU matmul + one sigmoid(96) + tanh(32).
    #  Mask gating reproduces pack_padded_sequence: padded steps hold the
    #  state (bwd starts fresh at the last valid token) and store zeros.
    def step(s, carry):
        h, c = carry                                                # (B,2H) f32
        rs = T - 1 - s
        gx = jnp.where(fwd_sel_g, gx_ref[s], gx_ref[rs])            # (B,8H)
        gates = gx + jnp.dot(h.astype(bf16), whh,
                             preferred_element_type=f32)
        sig = jax.nn.sigmoid(gates[:, 0:3 * H2])                    # i|f|o fused
        i_g = sig[:, 0:H2]
        f_g = sig[:, H2:2 * H2]
        o_g = sig[:, 2 * H2:3 * H2]
        g_g = jnp.tanh(gates[:, 3 * H2:4 * H2])
        c_new = f_g * c + i_g * g_g
        h_new = o_g * jnp.tanh(c_new)

        m = jnp.where(fwd_sel_h, mask_ref[s], mask_ref[rs])         # (B,2H)
        h_next = m * h_new + (1.0 - m) * h
        c_next = m * c_new + (1.0 - m) * c
        hm = m * h_new                                              # zero if pad
        henc_ref[s, :, 0:H] = hm[:, 0:H]          # fwd hidden at time s
        henc_ref[rs, :, H:H2] = hm[:, H:H2]       # bwd hidden at time T-1-s
        return (h_next, c_next)

    zeros = jnp.zeros((B, H2), f32)
    lax.fori_loop(0, T, step, (zeros, zeros), unroll=True)

    # ---- 3. Decoder: relation-aware masked attention + tagger MLP.
    h_enc = henc_ref[...]                                           # (T,B,2H) f32
    h_bf = h_enc.astype(bf16)
    rel = rel_ref[...]                                              # (B,R) bf16

    # Fused matmul over h_enc: first A lanes -> attention, last K -> tagger.
    hc = jnp.dot(h_bf.reshape(T * B, H2), whc_ref[...],
                 preferred_element_type=f32).reshape(T, B, A + K)
    att_h = hc[:, :, 0:A]                                           # (T,B,A)
    hh = hc[:, :, A:A + K]                                          # (T,B,K)

    att_r = jnp.dot(rel, wr_ref[...], preferred_element_type=f32)   # (B,A)
    att = jnp.tanh(att_h + att_r[None, :, :])
    e = jnp.sum(att * v_ref[...][None, :, :], axis=-1, keepdims=True)  # (T,B,1)

    m3 = mask_ref[...]                                              # (T,B,1)
    e = jnp.where(m3 > 0.0, e, jnp.float32(-1e9))
    e = e - jnp.max(e, axis=0, keepdims=True)
    p = jnp.exp(e) * m3
    denom = jnp.sum(p, axis=0, keepdims=True) + 1e-9
    alpha = p / denom                                               # exact softmax

    ctx = jnp.sum(alpha * h_enc, axis=0)                            # (B,2H)

    # per-batch part of the tagger input computed once, not per token
    per_b = (jnp.dot(rel, w1r_ref[...], preferred_element_type=f32)
             + jnp.dot(ctx.astype(bf16), w1c_ref[...],
                       preferred_element_type=f32)
             + b1_ref[...])                                         # (B,K)
    hid = jnp.tanh(hh + per_b[None, :, :])                          # (T,B,K)
    logits = jnp.dot(hid.astype(bf16).reshape(T * B, K), w2_ref[...],
                     preferred_element_type=f32).reshape(T, B, TAGP)
    out_ref[...] = logits + b2_ref[...][None, :, :]


# ----------------------------------------------------------------------------
# Weight repacking (interleaved gate columns / block-diag recurrent weight).
# ----------------------------------------------------------------------------
def _prepare_encoder_weights(params):
    H = params["whh_f"].shape[0]

    def gates(w):  # gate order in params: [i, f, g, o]
        return (w[..., 0:H], w[..., H:2 * H],
                w[..., 2 * H:3 * H], w[..., 3 * H:4 * H])

    # dense input projection, columns: [i_f i_b | f_f f_b | o_f o_b | g_f g_b]
    i_f, f_f, g_f, o_f = gates(params["wih_f"])
    i_b, f_b, g_b, o_b = gates(params["wih_b"])
    wih_big = jnp.concatenate([i_f, i_b, f_f, f_b, o_f, o_b, g_f, g_b], axis=1)

    # block-diagonal recurrent weight (rows 0:H -> fwd state, H:2H -> bwd state)
    ri_f, rf_f, rg_f, ro_f = gates(params["whh_f"])
    ri_b, rf_b, rg_b, ro_b = gates(params["whh_b"])
    z = jnp.zeros((H, H), jnp.float32)
    row_f = jnp.concatenate([ri_f, z, rf_f, z, ro_f, z, rg_f, z], axis=1)
    row_b = jnp.concatenate([z, ri_b, z, rf_b, z, ro_b, z, rg_b], axis=1)
    whh_blk = jnp.concatenate([row_f, row_b], axis=0)               # (2H, 8H)

    bi_f, bf_f, bg_f, bo_f = gates(params["b_f"])
    bi_b, bf_b, bg_b, bo_b = gates(params["b_b"])
    b_big = jnp.concatenate([bi_f, bi_b, bf_f, bf_b, bo_f, bo_b, bg_f, bg_b],
                            axis=1)                                 # (1, 8H)
    return wih_big, whh_blk, b_big


def _prepare_decoder_weights(params, tagp):
    H2 = params["att_wh"].shape[0]
    R = params["att_wr"].shape[0]
    A = params["att_wh"].shape[1]
    K = params["dec_w1"].shape[1]
    tag = params["dec_w2"].shape[1]

    w1 = params["dec_w1"]
    w1h = w1[0:H2]
    w1r = w1[H2:H2 + R]
    w1c = w1[H2 + R:]
    w_hc = jnp.concatenate([params["att_wh"], w1h], axis=1)         # (2H, A+K)
    v_row = params["att_v"].reshape(1, A)
    w2p = jnp.zeros((K, tagp), jnp.float32).at[:, :tag].set(params["dec_w2"])
    b2p = jnp.zeros((1, tagp), jnp.float32).at[:, :tag].set(params["dec_b2"])
    return w_hc, v_row, w1r, w1c, w2p, b2p


# ----------------------------------------------------------------------------
# Parameters (synthetic, deterministic) — structure of the original module.
# ----------------------------------------------------------------------------
def init_params(key,
                vocab=50, word_dim=32,
                hidden=16,                 # per-direction LSTM hidden
                num_rel=5, rel_dim=16,
                att_dim=32, dec_hidden=32, tag_size=9):
    ks = jax.random.split(key, 16)
    s = 0.1
    return {
        "word_emb": s * jax.random.normal(ks[0], (vocab, word_dim), jnp.float32),
        "rel_emb":  s * jax.random.normal(ks[1], (num_rel, rel_dim), jnp.float32),
        # forward LSTM (gate order i, f, g, o)
        "wih_f": s * jax.random.normal(ks[2], (word_dim, 4 * hidden), jnp.float32),
        "whh_f": s * jax.random.normal(ks[3], (hidden, 4 * hidden), jnp.float32),
        "b_f":   jnp.zeros((1, 4 * hidden), jnp.float32),
        # backward LSTM
        "wih_b": s * jax.random.normal(ks[4], (word_dim, 4 * hidden), jnp.float32),
        "whh_b": s * jax.random.normal(ks[5], (hidden, 4 * hidden), jnp.float32),
        "b_b":   jnp.zeros((1, 4 * hidden), jnp.float32),
        # decoder attention
        "att_wh": s * jax.random.normal(ks[6], (2 * hidden, att_dim), jnp.float32),
        "att_wr": s * jax.random.normal(ks[7], (rel_dim, att_dim), jnp.float32),
        "att_v":  s * jax.random.normal(ks[8], (att_dim, 1), jnp.float32),
        # decoder tagger MLP (rows: [hidden | relation | context])
        "dec_w1": s * jax.random.normal(
            ks[9], (2 * hidden + rel_dim + 2 * hidden, dec_hidden), jnp.float32),
        "dec_b1": jnp.zeros((1, dec_hidden), jnp.float32),
        "dec_w2": s * jax.random.normal(ks[10], (dec_hidden, tag_size), jnp.float32),
        "dec_b2": jnp.zeros((1, tag_size), jnp.float32),
    }


# ----------------------------------------------------------------------------
# Full module forward.
# ----------------------------------------------------------------------------
@functools.partial(jax.jit, static_argnames=("tag_size",))
def rel_based_labeling_forward(params, sent, sen_len, rel, mask, tag_size=9):
    del sen_len  # packing handled by the in-kernel mask gating (see kernel)
    bf16 = jnp.bfloat16
    H = params["whh_f"].shape[0]
    B, T = sent.shape

    # Embedding lookups (glue: gather stays in XLA); bf16 halves DMA bytes.
    emb = jnp.take(params["word_emb"].astype(bf16), sent, axis=0)   # (B,T,D) bf16
    rel_e = jnp.take(params["rel_emb"].astype(bf16), rel, axis=0)   # (B,R)  bf16
    x_tm = jnp.transpose(emb, (1, 0, 2))                            # (T,B,D)
    mask3 = jnp.transpose(mask.astype(jnp.float32), (1, 0))[:, :, None]  # (T,B,1)

    # Pad batch to a multiple of the batch block (sublane-dense tiles).
    BB = 8
    Bp = ((B + BB - 1) // BB) * BB
    pad = Bp - B
    if pad:
        x_tm = jnp.pad(x_tm, ((0, 0), (0, pad), (0, 0)))
        mask3 = jnp.pad(mask3, ((0, 0), (0, pad), (0, 0)))
        rel_e = jnp.pad(rel_e, ((0, pad), (0, 0)))

    wih_big, whh_blk, b_big = _prepare_encoder_weights(params)
    TAGP = 128 * ((tag_size + 127) // 128)                          # lane-dense out
    w_hc, v_row, w1r, w1c, w2p, b2p = _prepare_decoder_weights(params, TAGP)

    D = wih_big.shape[0]
    G = wih_big.shape[1]            # 8H
    H2 = 2 * H
    A = params["att_wh"].shape[1]
    K = params["dec_w1"].shape[1]
    R = rel_e.shape[1]
    AK = A + K

    def full_spec(shape):
        return pl.BlockSpec(shape, lambda b: tuple(0 for _ in shape))

    out_tm = pl.pallas_call(
        _rel_labeling_kernel,
        out_shape=jax.ShapeDtypeStruct((T, Bp, TAGP), jnp.float32),
        grid=(Bp // BB,),
        in_specs=[
            pl.BlockSpec((T, BB, D), lambda b: (0, b, 0)),          # x (bf16)
            pl.BlockSpec((T, BB, 1), lambda b: (0, b, 0)),          # mask
            pl.BlockSpec((BB, R), lambda b: (b, 0)),                # rel (bf16)
            full_spec((D, G)),                                      # wih
            full_spec((H2, G)),                                     # whh
            full_spec((1, G)),                                      # gate bias
            full_spec((H2, AK)),                                    # fused wh|w1h
            full_spec((R, A)),                                      # wr
            full_spec((1, A)),                                      # v
            full_spec((R, K)),                                      # w1r
            full_spec((H2, K)),                                     # w1c
            full_spec((1, K)),                                      # b1
            full_spec((K, TAGP)),                                   # w2
            full_spec((1, TAGP)),                                   # b2
        ],
        out_specs=pl.BlockSpec((T, BB, TAGP), lambda b: (0, b, 0)),
        scratch_shapes=[pltpu.VMEM((T, BB, G), jnp.float32),        # gate pre-acts
                        pltpu.VMEM((T, BB, H2), jnp.float32)],      # h_enc
        compiler_params=pltpu.CompilerParams(
            dimension_semantics=("parallel",),
            vmem_limit_bytes=48 * 1024 * 1024),
    )(x_tm, mask3, rel_e,
      wih_big.astype(bf16), whh_blk.astype(bf16), b_big,
      w_hc.astype(bf16), params["att_wr"].astype(bf16), v_row,
      w1r.astype(bf16), w1c.astype(bf16), params["dec_b1"],
      w2p.astype(bf16), b2p)

    # back to batch-major, drop batch/tag padding (tiny; stays in XLA glue)
    return jnp.transpose(out_tm, (1, 0, 2))[:B, :, :tag_size]


if __name__ == "__main__":
    key = jax.random.PRNGKey(0)
    pkey, k1, k2 = jax.random.split(key, 3)

    B, T = 2, 8
    vocab, num_rel, tag_size = 50, 5, 9

    params = init_params(pkey, vocab=vocab, num_rel=num_rel, tag_size=tag_size)

    sent = jax.random.randint(k1, (B, T), 0, vocab, dtype=jnp.int32)
    rel = jax.random.randint(k2, (B,), 0, num_rel, dtype=jnp.int32)
    sen_len = jnp.array([T, 5], dtype=jnp.int32)
    mask = (jnp.arange(T)[None, :] < sen_len[:, None]).astype(jnp.float32)

    out = rel_based_labeling_forward(params, sent, sen_len, rel, mask,
                                     tag_size=tag_size)
    out = jax.block_until_ready(out)
    assert out.shape == (B, T, tag_size) and out.dtype == jnp.float32
    assert bool(jnp.all(jnp.isfinite(out)))
    print("KERNEL_OK")
</pallas_src>

<mosaic_0001>
module attributes {stable_mosaic.version = 11 : i64} {
  func.func @_rel_labeling_kernel(%arg0: i32, %arg1: memref<8x8x32xbf16, #tpu.memory_space<vmem>>, %arg2: memref<8x8x1xf32, #tpu.memory_space<vmem>>, %arg3: memref<8x16xbf16, #tpu.memory_space<vmem>>, %arg4: memref<32x128xbf16, #tpu.memory_space<vmem>>, %arg5: memref<32x128xbf16, #tpu.memory_space<vmem>>, %arg6: memref<1x128xf32, #tpu.memory_space<vmem>>, %arg7: memref<32x64xbf16, #tpu.memory_space<vmem>>, %arg8: memref<16x32xbf16, #tpu.memory_space<vmem>>, %arg9: memref<1x32xf32, #tpu.memory_space<vmem>>, %arg10: memref<16x32xbf16, #tpu.memory_space<vmem>>, %arg11: memref<32x32xbf16, #tpu.memory_space<vmem>>, %arg12: memref<1x32xf32, #tpu.memory_space<vmem>>, %arg13: memref<32x128xbf16, #tpu.memory_space<vmem>>, %arg14: memref<1x128xf32, #tpu.memory_space<vmem>>, %arg15: memref<8x8x128xf32, #tpu.memory_space<vmem>>, %arg16: memref<8x8x128xf32, #tpu.memory_space<vmem>>, %arg17: memref<8x8x32xf32, #tpu.memory_space<vmem>>) attributes {dimension_semantics = [#tpu.dimension_semantics<parallel>], iteration_bounds = array<i64: 1>, scalar_prefetch = 0 : i64, scratch_operands = 2 : i64, tpu.core_type = #tpu.core_type<tc>, window_params = [{transform_indices = @transform_0, window_bounds = array<i64: 8, 8, 32>}, {transform_indices = @transform_1, window_bounds = array<i64: 8, 8, 1>}, {transform_indices = @transform_2, window_bounds = array<i64: 8, 16>}, {pipeline_mode = #tpu.pipeline_mode<synchronous>, transform_indices = @transform_3, window_bounds = array<i64: 32, 128>}, {pipeline_mode = #tpu.pipeline_mode<synchronous>, transform_indices = @transform_4, window_bounds = array<i64: 32, 128>}, {pipeline_mode = #tpu.pipeline_mode<synchronous>, transform_indices = @transform_5, window_bounds = array<i64: 1, 128>}, {pipeline_mode = #tpu.pipeline_mode<synchronous>, transform_indices = @transform_6, window_bounds = array<i64: 32, 64>}, {pipeline_mode = #tpu.pipeline_mode<synchronous>, transform_indices = @transform_7, window_bounds = array<i64: 16, 32>}, {pipeline_mode = #tpu.pipeline_mode<synchronous>, transform_indices = @transform_8, window_bounds = array<i64: 1, 32>}, {pipeline_mode = #tpu.pipeline_mode<synchronous>, transform_indices = @transform_9, window_bounds = array<i64: 16, 32>}, {pipeline_mode = #tpu.pipeline_mode<synchronous>, transform_indices = @transform_10, window_bounds = array<i64: 32, 32>}, {pipeline_mode = #tpu.pipeline_mode<synchronous>, transform_indices = @transform_11, window_bounds = array<i64: 1, 32>}, {pipeline_mode = #tpu.pipeline_mode<synchronous>, transform_indices = @transform_12, window_bounds = array<i64: 32, 128>}, {pipeline_mode = #tpu.pipeline_mode<synchronous>, transform_indices = @transform_13, window_bounds = array<i64: 1, 128>}, {transform_indices = @transform_14, window_bounds = array<i64: 8, 8, 128>}]} {
    %c0 = arith.constant 0 : index
    %c0_0 = arith.constant 0 : index
    %c0_1 = arith.constant 0 : index
    %0 = vector.load %arg1[%c0, %c0_0, %c0_1] : memref<8x8x32xbf16, #tpu.memory_space<vmem>>, vector<8x8x32xbf16>
    %1 = vector.shape_cast %0 : vector<8x8x32xbf16> to vector<64x32xbf16>
    %c0_2 = arith.constant 0 : index
    %c0_3 = arith.constant 0 : index
    %2 = vector.load %arg4[%c0_2, %c0_3] : memref<32x128xbf16, #tpu.memory_space<vmem>>, vector<32x128xbf16>
    %cst = arith.constant dense<0.000000e+00> : vector<64x128xf32>
    %3 = tpu.matmul %1, %2, %cst {dimension_numbers = #tpu.dot_dimension_numbers<[1], [0], [0], [1], [0, 0, 1, 1], [], []>} : vector<64x32xbf16>, vector<32x128xbf16>, vector<64x128xf32> -> vector<64x128xf32>
    %4 = vector.shape_cast %3 : vector<64x128xf32> to vector<8x8x128xf32>
    %c0_4 = arith.constant 0 : index
    %c0_5 = arith.constant 0 : index
    %5 = vector.load %arg6[%c0_4, %c0_5] : memref<1x128xf32, #tpu.memory_space<vmem>>, vector<1x128xf32>
    %6 = vector.shape_cast %5 : vector<1x128xf32> to vector<1x1x128xf32>
    %7 = vector.broadcast %6 : vector<1x1x128xf32> to vector<8x8x128xf32>
    %8 = arith.addf %4, %7 : vector<8x8x128xf32>
    %c0_6 = arith.constant 0 : index
    %c0_7 = arith.constant 0 : index
    %c0_8 = arith.constant 0 : index
    %9 = vector.load %arg16[%c0_6, %c0_7, %c0_8] : memref<8x8x128xf32, #tpu.memory_space<vmem>>, vector<8x8x128xf32>
    tpu.vector_store %arg16[%c0_6, %c0_7, %c0_8], %8 {strides = array<i32>} : memref<8x8x128xf32, #tpu.memory_space<vmem>>, vector<8x8x128xf32>,
    %c0_9 = arith.constant 0 : index
    %c0_10 = arith.constant 0 : index
    %10 = vector.load %arg5[%c0_9, %c0_10] : memref<32x128xbf16, #tpu.memory_space<vmem>>, vector<32x128xbf16>
    %11 = tpu.iota {dimensions = array<i32: 1>} : vector<8x128xi32>
    %c32_i32 = arith.constant 32 : i32
    %c0_i32 = arith.constant 0 : i32
    %12 = arith.cmpi eq, %c32_i32, %c0_i32 : i32
    %c1_i32 = arith.constant 1 : i32
    %13 = arith.select %12, %c1_i32, %c32_i32 : i32
    %14 = vector.broadcast %13 : i32 to vector<8x128xi32>
    %15 = arith.remsi %11, %14 : vector<8x128xi32>
    %c0_i32_11 = arith.constant 0 : i32
    %16 = vector.broadcast %c0_i32_11 : i32 to vector<8x128xi32>
    %17 = arith.cmpi ne, %15, %16 : vector<8x128xi32>
    %c0_i32_12 = arith.constant 0 : i32
    %18 = vector.broadcast %c0_i32_12 : i32 to vector<8x128xi32>
    %19 = arith.cmpi slt, %15, %18 : vector<8x128xi32>
    %c0_i32_13 = arith.constant 0 : i32
    %20 = arith.cmpi slt, %13, %c0_i32_13 : i32
    %21 = vector.broadcast %20 : i1 to vector<8x128xi1>
    %22 = vector.broadcast %21 : vector<8x128xi1> to vector<8x128xi1>
    %23 = arith.xori %19, %22 : vector<8x128xi1>
    %24 = arith.andi %23, %17 : vector<8x128xi1>
    %25 = vector.broadcast %13 : i32 to vector<8x128xi32>
    %26 = arith.addi %15, %25 : vector<8x128xi32>
    %27 = arith.select %24, %26, %15 : vector<8x128xi1>, vector<8x128xi32>
    %c16_i32 = arith.constant 16 : i32
    %28 = vector.broadcast %c16_i32 : i32 to vector<8x128xi32>
    %29 = arith.cmpi slt, %27, %28 : vector<8x128xi32>
    %30 = tpu.iota {dimensions = array<i32: 1>} : vector<8x32xi32>
    %c16_i32_14 = arith.constant 16 : i32
    %31 = vector.broadcast %c16_i32_14 : i32 to vector<8x32xi32>
    %32 = arith.cmpi slt, %30, %31 : vector<8x32xi32>
    %cst_15 = arith.constant 0.000000e+00 : f32
    %33 = vector.broadcast %cst_15 : f32 to vector<8x32xf32>
    %c0_i32_16 = arith.constant 0 : i32
    %c7_i32 = arith.constant 7 : i32
    %34 = arith.subi %c7_i32, %c0_i32_16 : i32
    %35 = arith.index_cast %c0_i32_16 : i32 to index
    %c0_17 = arith.constant 0 : index
    %c0_18 = arith.constant 0 : index
    %36 = vector.load %arg16[%35, %c0_17, %c0_18] : memref<8x8x128xf32, #tpu.memory_space<vmem>>, vector<1x8x128xf32>
    %37 = vector.shape_cast %36 : vector<1x8x128xf32> to vector<8x128xf32>
    %38 = arith.index_cast %34 : i32 to index
    %c0_19 = arith.constant 0 : index
    %c0_20 = arith.constant 0 : index
    %39 = vector.load %arg16[%38, %c0_19, %c0_20] : memref<8x8x128xf32, #tpu.memory_space<vmem>>, vector<1x8x128xf32>
    %40 = vector.shape_cast %39 : vector<1x8x128xf32> to vector<8x128xf32>
    %41 = arith.select %29, %37, %40 : vector<8x128xi1>, vector<8x128xf32>
    %42 = arith.truncf %33 : vector<8x32xf32> to vector<8x32xbf16>
    %cst_21 = arith.constant dense<0.000000e+00> : vector<8x128xf32>
    %43 = tpu.matmul %42, %10, %cst_21 {dimension_numbers = #tpu.dot_dimension_numbers<[1], [0], [0], [1], [0, 0, 1, 1], [], []>} : vector<8x32xbf16>, vector<32x128xbf16>, vector<8x128xf32> -> vector<8x128xf32>
    %44 = arith.addf %41, %43 : vector<8x128xf32>
    %45 = vector.extract_strided_slice %44 {offsets = [0, 0], sizes = [8, 96], strides = [1, 1]} : vector<8x128xf32> to vector<8x96xf32>
    %46 = arith.negf %45 : vector<8x96xf32>
    %47 = math.exp %46 : vector<8x96xf32>
    %cst_22 = arith.constant 1.000000e+00 : f32
    %48 = vector.broadcast %cst_22 : f32 to vector<8x96xf32>
    %49 = arith.addf %48, %47 : vector<8x96xf32>
    %50 = arith.divf %48, %49 : vector<8x96xf32>
    %51 = vector.extract_strided_slice %50 {offsets = [0, 0], sizes = [8, 32], strides = [1, 1]} : vector<8x96xf32> to vector<8x32xf32>
    %52 = vector.extract_strided_slice %50 {offsets = [0, 32], sizes = [8, 32], strides = [1, 1]} : vector<8x96xf32> to vector<8x32xf32>
    %53 = vector.extract_strided_slice %50 {offsets = [0, 64], sizes = [8, 32], strides = [1, 1]} : vector<8x96xf32> to vector<8x32xf32>
    %54 = vector.extract_strided_slice %44 {offsets = [0, 96], sizes = [8, 32], strides = [1, 1]} : vector<8x128xf32> to vector<8x32xf32>
    %55 = math.tanh %54 : vector<8x32xf32>
    %56 = arith.mulf %52, %33 : vector<8x32xf32>
    %57 = arith.mulf %51, %55 : vector<8x32xf32>
    %58 = arith.addf %56, %57 : vector<8x32xf32>
    %59 = math.tanh %58 : vector<8x32xf32>
    %60 = arith.mulf %53, %59 : vector<8x32xf32>
    %61 = arith.index_cast %c0_i32_16 : i32 to index
    %c0_23 = arith.constant 0 : index
    %c0_24 = arith.constant 0 : index
    %62 = vector.load %arg2[%61, %c0_23, %c0_24] : memref<8x8x1xf32, #tpu.memory_space<vmem>>, vector<1x8x1xf32>
    %63 = vector.shape_cast %62 : vector<1x8x1xf32> to vector<8x1xf32>
    %64 = arith.index_cast %34 : i32 to index
    %c0_25 = arith.constant 0 : index
    %c0_26 = arith.constant 0 : index
    %65 = vector.load %arg2[%64, %c0_25, %c0_26] : memref<8x8x1xf32, #tpu.memory_space<vmem>>, vector<1x8x1xf32>
    %66 = vector.shape_cast %65 : vector<1x8x1xf32> to vector<8x1xf32>
    %67 = vector.shape_cast %63 : vector<8x1xf32> to vector<8x1xf32>
    %68 = vector.broadcast %67 : vector<8x1xf32> to vector<8x32xf32>
    %69 = vector.shape_cast %66 : vector<8x1xf32> to vector<8x1xf32>
    %70 = vector.broadcast %69 : vector<8x1xf32> to vector<8x32xf32>
    %71 = arith.select %32, %68, %70 : vector<8x32xi1>, vector<8x32xf32>
    %72 = arith.mulf %71, %60 : vector<8x32xf32>
    %cst_27 = arith.constant 1.000000e+00 : f32
    %73 = vector.broadcast %cst_27 : f32 to vector<8x32xf32>
    %74 = arith.subf %73, %71 : vector<8x32xf32>
    %75 = arith.mulf %74, %33 : vector<8x32xf32>
    %76 = arith.addf %72, %75 : vector<8x32xf32>
    %77 = arith.mulf %71, %58 : vector<8x32xf32>
    %cst_28 = arith.constant 1.000000e+00 : f32
    %78 = vector.broadcast %cst_28 : f32 to vector<8x32xf32>
    %79 = arith.subf %78, %71 : vector<8x32xf32>
    %80 = arith.mulf %79, %33 : vector<8x32xf32>
    %81 = arith.addf %77, %80 : vector<8x32xf32>
    %82 = arith.mulf %71, %60 : vector<8x32xf32>
    %83 = vector.extract_strided_slice %82 {offsets = [0, 0], sizes = [8, 16], strides = [1, 1]} : vector<8x32xf32> to vector<8x16xf32>
    %84 = arith.index_cast %c0_i32_16 : i32 to index
    %c0_29 = arith.constant 0 : index
    %c0_30 = arith.constant 0 : index
    %85 = vector.load %arg17[%84, %c0_29, %c0_30] : memref<8x8x32xf32, #tpu.memory_space<vmem>>, vector<1x8x16xf32>
    %86 = vector.shape_cast %85 : vector<1x8x16xf32> to vector<8x16xf32>
    %87 = vector.shape_cast %83 : vector<8x16xf32> to vector<1x8x16xf32>
    tpu.vector_store %arg17[%84, %c0_29, %c0_30], %87 {strides = array<i32>} : memref<8x8x32xf32, #tpu.memory_space<vmem>>, vector<1x8x16xf32>,
    %88 = vector.extract_strided_slice %82 {offsets = [0, 16], sizes = [8, 16], strides = [1, 1]} : vector<8x32xf32> to vector<8x16xf32>
    %89 = arith.index_cast %34 : i32 to index
    %c0_31 = arith.constant 0 : index
    %c16 = arith.constant 16 : index
    %90 = vector.load %arg17[%89, %c0_31, %c16] : memref<8x8x32xf32, #tpu.memory_space<vmem>>, vector<1x8x16xf32>
    %91 = vector.shape_cast %90 : vector<1x8x16xf32> to vector<8x16xf32>
    %92 = vector.shape_cast %88 : vector<8x16xf32> to vector<1x8x16xf32>
    tpu.vector_store %arg17[%89, %c0_31, %c16], %92 {strides = array<i32>} : memref<8x8x32xf32, #tpu.memory_space<vmem>>, vector<1x8x16xf32>,
    %c1_i32_32 = arith.constant 1 : i32
    %c7_i32_33 = arith.constant 7 : i32
    %93 = arith.subi %c7_i32_33, %c1_i32_32 : i32
    %94 = arith.index_cast %c1_i32_32 : i32 to index
    %c0_34 = arith.constant 0 : index
    %c0_35 = arith.constant 0 : index
    %95 = vector.load %arg16[%94, %c0_34, %c0_35] : memref<8x8x128xf32, #tpu.memory_space<vmem>>, vector<1x8x128xf32>
    %96 = vector.shape_cast %95 : vector<1x8x128xf32> to vector<8x128xf32>
    %97 = arith.index_cast %93 : i32 to index
    %c0_36 = arith.constant 0 : index
    %c0_37 = arith.constant 0 : index
    %98 = vector.load %arg16[%97, %c0_36, %c0_37] : memref<8x8x128xf32, #tpu.memory_space<vmem>>, vector<1x8x128xf32>
    %99 = vector.shape_cast %98 : vector<1x8x128xf32> to vector<8x128xf32>
    %100 = arith.select %29, %96, %99 : vector<8x128xi1>, vector<8x128xf32>
    %101 = arith.truncf %76 : vector<8x32xf32> to vector<8x32xbf16>
    %cst_38 = arith.constant dense<0.000000e+00> : vector<8x128xf32>
    %102 = tpu.matmul %101, %10, %cst_38 {dimension_numbers = #tpu.dot_dimension_numbers<[1], [0], [0], [1], [0, 0, 1, 1], [], []>} : vector<8x32xbf16>, vector<32x128xbf16>, vector<8x128xf32> -> vector<8x128xf32>
    %103 = arith.addf %100, %102 : vector<8x128xf32>
    %104 = vector.extract_strided_slice %103 {offsets = [0, 0], sizes = [8, 96], strides = [1, 1]} : vector<8x128xf32> to vector<8x96xf32>
    %105 = arith.negf %104 : vector<8x96xf32>
    %106 = math.exp %105 : vector<8x96xf32>
    %cst_39 = arith.constant 1.000000e+00 : f32
    %107 = vector.broadcast %cst_39 : f32 to vector<8x96xf32>
    %108 = arith.addf %107, %106 : vector<8x96xf32>
    %109 = arith.divf %107, %108 : vector<8x96xf32>
    %110 = vector.extract_strided_slice %109 {offsets = [0, 0], sizes = [8, 32], strides = [1, 1]} : vector<8x96xf32> to vector<8x32xf32>
    %111 = vector.extract_strided_slice %109 {offsets = [0, 32], sizes = [8, 32], strides = [1, 1]} : vector<8x96xf32> to vector<8x32xf32>
    %112 = vector.extract_strided_slice %109 {offsets = [0, 64], sizes = [8, 32], strides = [1, 1]} : vector<8x96xf32> to vector<8x32xf32>
    %113 = vector.extract_strided_slice %103 {offsets = [0, 96], sizes = [8, 32], strides = [1, 1]} : vector<8x128xf32> to vector<8x32xf32>
    %114 = math.tanh %113 : vector<8x32xf32>
    %115 = arith.mulf %111, %81 : vector<8x32xf32>
    %116 = arith.mulf %110, %114 : vector<8x32xf32>
    %117 = arith.addf %115, %116 : vector<8x32xf32>
    %118 = math.tanh %117 : vector<8x32xf32>
    %119 = arith.mulf %112, %118 : vector<8x32xf32>
    %120 = arith.index_cast %c1_i32_32 : i32 to index
    %c0_40 = arith.constant 0 : index
    %c0_41 = arith.constant 0 : index
    %121 = vector.load %arg2[%120, %c0_40, %c0_41] : memref<8x8x1xf32, #tpu.memory_space<vmem>>, vector<1x8x1xf32>
    %122 = vector.shape_cast %121 : vector<1x8x1xf32> to vector<8x1xf32>
    %123 = arith.index_cast %93 : i32 to index
    %c0_42 = arith.constant 0 : index
    %c0_43 = arith.constant 0 : index
    %124 = vector.load %arg2[%123, %c0_42, %c0_43] : memref<8x8x1xf32, #tpu.memory_space<vmem>>, vector<1x8x1xf32>
    %125 = vector.shape_cast %124 : vector<1x8x1xf32> to vector<8x1xf32>
    %126 = vector.shape_cast %122 : vector<8x1xf32> to vector<8x1xf32>
    %127 = vector.broadcast %126 : vector<8x1xf32> to vector<8x32xf32>
    %128 = vector.shape_cast %125 : vector<8x1xf32> to vector<8x1xf32>
    %129 = vector.broadcast %128 : vector<8x1xf32> to vector<8x32xf32>
    %130 = arith.select %32, %127, %129 : vector<8x32xi1>, vector<8x32xf32>
    %131 = arith.mulf %130, %119 : vector<8x32xf32>
    %cst_44 = arith.constant 1.000000e+00 : f32
    %132 = vector.broadcast %cst_44 : f32 to vector<8x32xf32>
    %133 = arith.subf %132, %130 : vector<8x32xf32>
    %134 = arith.mulf %133, %76 : vector<8x32xf32>
    %135 = arith.addf %131, %134 : vector<8x32xf32>
    %136 = arith.mulf %130, %117 : vector<8x32xf32>
    %cst_45 = arith.constant 1.000000e+00 : f32
    %137 = vector.broadcast %cst_45 : f32 to vector<8x32xf32>
    %138 = arith.subf %137, %130 : vector<8x32xf32>
    %139 = arith.mulf %138, %81 : vector<8x32xf32>
    %140 = arith.addf %136, %139 : vector<8x32xf32>
    %141 = arith.mulf %130, %119 : vector<8x32xf32>
    %142 = vector.extract_strided_slice %141 {offsets = [0, 0], sizes = [8, 16], strides = [1, 1]} : vector<8x32xf32> to vector<8x16xf32>
    %143 = arith.index_cast %c1_i32_32 : i32 to index
    %c0_46 = arith.constant 0 : index
    %c0_47 = arith.constant 0 : index
    %144 = vector.load %arg17[%143, %c0_46, %c0_47] : memref<8x8x32xf32, #tpu.memory_space<vmem>>, vector<1x8x16xf32>
    %145 = vector.shape_cast %144 : vector<1x8x16xf32> to vector<8x16xf32>
    %146 = vector.shape_cast %142 : vector<8x16xf32> to vector<1x8x16xf32>
    tpu.vector_store %arg17[%143, %c0_46, %c0_47], %146 {strides = array<i32>} : memref<8x8x32xf32, #tpu.memory_space<vmem>>, vector<1x8x16xf32>,
    %147 = vector.extract_strided_slice %141 {offsets = [0, 16], sizes = [8, 16], strides = [1, 1]} : vector<8x32xf32> to vector<8x16xf32>
    %148 = arith.index_cast %93 : i32 to index
    %c0_48 = arith.constant 0 : index
    %c16_49 = arith.constant 16 : index
    %149 = vector.load %arg17[%148, %c0_48, %c16_49] : memref<8x8x32xf32, #tpu.memory_space<vmem>>, vector<1x8x16xf32>
    %150 = vector.shape_cast %149 : vector<1x8x16xf32> to vector<8x16xf32>
    %151 = vector.shape_cast %147 : vector<8x16xf32> to vector<1x8x16xf32>
    tpu.vector_store %arg17[%148, %c0_48, %c16_49], %151 {strides = array<i32>} : memref<8x8x32xf32, #tpu.memory_space<vmem>>, vector<1x8x16xf32>,
    %c2_i32 = arith.constant 2 : i32
    %c7_i32_50 = arith.constant 7 : i32
    %152 = arith.subi %c7_i32_50, %c2_i32 : i32
    %153 = arith.index_cast %c2_i32 : i32 to index
    %c0_51 = arith.constant 0 : index
    %c0_52 = arith.constant 0 : index
    %154 = vector.load %arg16[%153, %c0_51, %c0_52] : memref<8x8x128xf32, #tpu.memory_space<vmem>>, vector<1x8x128xf32>
    %155 = vector.shape_cast %154 : vector<1x8x128xf32> to vector<8x128xf32>
    %156 = arith.index_cast %152 : i32 to index
    %c0_53 = arith.constant 0 : index
    %c0_54 = arith.constant 0 : index
    %157 = vector.load %arg16[%156, %c0_53, %c0_54] : memref<8x8x128xf32, #tpu.memory_space<vmem>>, vector<1x8x128xf32>
    %158 = vector.shape_cast %157 : vector<1x8x128xf32> to vector<8x128xf32>
    %159 = arith.select %29, %155, %158 : vector<8x128xi1>, vector<8x128xf32>
    %160 = arith.truncf %135 : vector<8x32xf32> to vector<8x32xbf16>
    %cst_55 = arith.constant dense<0.000000e+00> : vector<8x128xf32>
    %161 = tpu.matmul %160, %10, %cst_55 {dimension_numbers = #tpu.dot_dimension_numbers<[1], [0], [0], [1], [0, 0, 1, 1], [], []>} : vector<8x32xbf16>, vector<32x128xbf16>, vector<8x128xf32> -> vector<8x128xf32>
    %162 = arith.addf %159, %161 : vector<8x128xf32>
    %163 = vector.extract_strided_slice %162 {offsets = [0, 0], sizes = [8, 96], strides = [1, 1]} : vector<8x128xf32> to vector<8x96xf32>
    %164 = arith.negf %163 : vector<8x96xf32>
    %165 = math.exp %164 : vector<8x96xf32>
    %cst_56 = arith.constant 1.000000e+00 : f32
    %166 = vector.broadcast %cst_56 : f32 to vector<8x96xf32>
    %167 = arith.addf %166, %165 : vector<8x96xf32>
    %168 = arith.divf %166, %167 : vector<8x96xf32>
    %169 = vector.extract_strided_slice %168 {offsets = [0, 0], sizes = [8, 32], strides = [1, 1]} : vector<8x96xf32> to vector<8x32xf32>
    %170 = vector.extract_strided_slice %168 {offsets = [0, 32], sizes = [8, 32], strides = [1, 1]} : vector<8x96xf32> to vector<8x32xf32>
    %171 = vector.extract_strided_slice %168 {offsets = [0, 64], sizes = [8, 32], strides = [1, 1]} : vector<8x96xf32> to vector<8x32xf32>
    %172 = vector.extract_strided_slice %162 {offsets = [0, 96], sizes = [8, 32], strides = [1, 1]} : vector<8x128xf32> to vector<8x32xf32>
    %173 = math.tanh %172 : vector<8x32xf32>
    %174 = arith.mulf %170, %140 : vector<8x32xf32>
    %175 = arith.mulf %169, %173 : vector<8x32xf32>
    %176 = arith.addf %174, %175 : vector<8x32xf32>
    %177 = math.tanh %176 : vector<8x32xf32>
    %178 = arith.mulf %171, %177 : vector<8x32xf32>
    %179 = arith.index_cast %c2_i32 : i32 to index
    %c0_57 = arith.constant 0 : index
    %c0_58 = arith.constant 0 : index
    %180 = vector.load %arg2[%179, %c0_57, %c0_58] : memref<8x8x1xf32, #tpu.memory_space<vmem>>, vector<1x8x1xf32>
    %181 = vector.shape_cast %180 : vector<1x8x1xf32> to vector<8x1xf32>
    %182 = arith.index_cast %152 : i32 to index
    %c0_59 = arith.constant 0 : index
    %c0_60 = arith.constant 0 : index
    %183 = vector.load %arg2[%182, %c0_59, %c0_60] : memref<8x8x1xf32, #tpu.memory_space<vmem>>, vector<1x8x1xf32>
    %184 = vector.shape_cast %183 : vector<1x8x1xf32> to vector<8x1xf32>
    %185 = vector.shape_cast %181 : vector<8x1xf32> to vector<8x1xf32>
    %186 = vector.broadcast %185 : vector<8x1xf32> to vector<8x32xf32>
    %187 = vector.shape_cast %184 : vector<8x1xf32> to vector<8x1xf32>
    %188 = vector.broadcast %187 : vector<8x1xf32> to vector<8x32xf32>
    %189 = arith.select %32, %186, %188 : vector<8x32xi1>, vector<8x32xf32>
    %190 = arith.mulf %189, %178 : vector<8x32xf32>
    %cst_61 = arith.constant 1.000000e+00 : f32
    %191 = vector.broadcast %cst_61 : f32 to vector<8x32xf32>
    %192 = arith.subf %191, %189 : vector<8x32xf32>
    %193 = arith.mulf %192, %135 : vector<8x32xf32>
    %194 = arith.addf %190, %193 : vector<8x32xf32>
    %195 = arith.mulf %189, %176 : vector<8x32xf32>
    %cst_62 = arith.constant 1.000000e+00 : f32
    %196 = vector.broadcast %cst_62 : f32 to vector<8x32xf32>
    %197 = arith.subf %196, %189 : vector<8x32xf32>
    %198 = arith.mulf %197, %140 : vector<8x32xf32>
    %199 = arith.addf %195, %198 : vector<8x32xf32>
    %200 = arith.mulf %189, %178 : vector<8x32xf32>
    %201 = vector.extract_strided_slice %200 {offsets = [0, 0], sizes = [8, 16], strides = [1, 1]} : vector<8x32xf32> to vector<8x16xf32>
    %202 = arith.index_cast %c2_i32 : i32 to index
    %c0_63 = arith.constant 0 : index
    %c0_64 = arith.constant 0 : index
    %203 = vector.load %arg17[%202, %c0_63, %c0_64] : memref<8x8x32xf32, #tpu.memory_space<vmem>>, vector<1x8x16xf32>
    %204 = vector.shape_cast %203 : vector<1x8x16xf32> to vector<8x16xf32>
    %205 = vector.shape_cast %201 : vector<8x16xf32> to vector<1x8x16xf32>
    tpu.vector_store %arg17[%202, %c0_63, %c0_64], %205 {strides = array<i32>} : memref<8x8x32xf32, #tpu.memory_space<vmem>>, vector<1x8x16xf32>,
    %206 = vector.extract_strided_slice %200 {offsets = [0, 16], sizes = [8, 16], strides = [1, 1]} : vector<8x32xf32> to vector<8x16xf32>
    %207 = arith.index_cast %152 : i32 to index
    %c0_65 = arith.constant 0 : index
    %c16_66 = arith.constant 16 : index
    %208 = vector.load %arg17[%207, %c0_65, %c16_66] : memref<8x8x32xf32, #tpu.memory_space<vmem>>, vector<1x8x16xf32>
    %209 = vector.shape_cast %208 : vector<1x8x16xf32> to vector<8x16xf32>
    %210 = vector.shape_cast %206 : vector<8x16xf32> to vector<1x8x16xf32>
    tpu.vector_store %arg17[%207, %c0_65, %c16_66], %210 {strides = array<i32>} : memref<8x8x32xf32, #tpu.memory_space<vmem>>, vector<1x8x16xf32>,
    %c3_i32 = arith.constant 3 : i32
    %c7_i32_67 = arith.constant 7 : i32
    %211 = arith.subi %c7_i32_67, %c3_i32 : i32
    %212 = arith.index_cast %c3_i32 : i32 to index
    %c0_68 = arith.constant 0 : index
    %c0_69 = arith.constant 0 : index
    %213 = vector.load %arg16[%212, %c0_68, %c0_69] : memref<8x8x128xf32, #tpu.memory_space<vmem>>, vector<1x8x128xf32>
    %214 = vector.shape_cast %213 : vector<1x8x128xf32> to vector<8x128xf32>
    %215 = arith.index_cast %211 : i32 to index
    %c0_70 = arith.constant 0 : index
    %c0_71 = arith.constant 0 : index
    %216 = vector.load %arg16[%215, %c0_70, %c0_71] : memref<8x8x128xf32, #tpu.memory_space<vmem>>, vector<1x8x128xf32>
    %217 = vector.shape_cast %216 : vector<1x8x128xf32> to vector<8x128xf32>
    %218 = arith.select %29, %214, %217 : vector<8x128xi1>, vector<8x128xf32>
    %219 = arith.truncf %194 : vector<8x32xf32> to vector<8x32xbf16>
    %cst_72 = arith.constant dense<0.000000e+00> : vector<8x128xf32>
    %220 = tpu.matmul %219, %10, %cst_72 {dimension_numbers = #tpu.dot_dimension_numbers<[1], [0], [0], [1], [0, 0, 1, 1], [], []>} : vector<8x32xbf16>, vector<32x128xbf16>, vector<8x128xf32> -> vector<8x128xf32>
    %221 = arith.addf %218, %220 : vector<8x128xf32>
    %222 = vector.extract_strided_slice %221 {offsets = [0, 0], sizes = [8, 96], strides = [1, 1]} : vector<8x128xf32> to vector<8x96xf32>
    %223 = arith.negf %222 : vector<8x96xf32>
    %224 = math.exp %223 : vector<8x96xf32>
    %cst_73 = arith.constant 1.000000e+00 : f32
    %225 = vector.broadcast %cst_73 : f32 to vector<8x96xf32>
    %226 = arith.addf %225, %224 : vector<8x96xf32>
    %227 = arith.divf %225, %226 : vector<8x96xf32>
    %228 = vector.extract_strided_slice %227 {offsets = [0, 0], sizes = [8, 32], strides = [1, 1]} : vector<8x96xf32> to vector<8x32xf32>
    %229 = vector.extract_strided_slice %227 {offsets = [0, 32], sizes = [8, 32], strides = [1, 1]} : vector<8x96xf32> to vector<8x32xf32>
    %230 = vector.extract_strided_slice %227 {offsets = [0, 64], sizes = [8, 32], strides = [1, 1]} : vector<8x96xf32> to vector<8x32xf32>
    %231 = vector.extract_strided_slice %221 {offsets = [0, 96], sizes = [8, 32], strides = [1, 1]} : vector<8x128xf32> to vector<8x32xf32>
    %232 = math.tanh %231 : vector<8x32xf32>
    %233 = arith.mulf %229, %199 : vector<8x32xf32>
    %234 = arith.mulf %228, %232 : vector<8x32xf32>
    %235 = arith.addf %233, %234 : vector<8x32xf32>
    %236 = math.tanh %235 : vector<8x32xf32>
    %237 = arith.mulf %230, %236 : vector<8x32xf32>
    %238 = arith.index_cast %c3_i32 : i32 to index
    %c0_74 = arith.constant 0 : index
    %c0_75 = arith.constant 0 : index
    %239 = vector.load %arg2[%238, %c0_74, %c0_75] : memref<8x8x1xf32, #tpu.memory_space<vmem>>, vector<1x8x1xf32>
    %240 = vector.shape_cast %239 : vector<1x8x1xf32> to vector<8x1xf32>
    %241 = arith.index_cast %211 : i32 to index
    %c0_76 = arith.constant 0 : index
    %c0_77 = arith.constant 0 : index
    %242 = vector.load %arg2[%241, %c0_76, %c0_77] : memref<8x8x1xf32, #tpu.memory_space<vmem>>, vector<1x8x1xf32>
    %243 = vector.shape_cast %242 : vector<1x8x1xf32> to vector<8x1xf32>
    %244 = vector.shape_cast %240 : vector<8x1xf32> to vector<8x1xf32>
    %245 = vector.broadcast %244 : vector<8x1xf32> to vector<8x32xf32>
    %246 = vector.shape_cast %243 : vector<8x1xf32> to vector<8x1xf32>
    %247 = vector.broadcast %246 : vector<8x1xf32> to vector<8x32xf32>
    %248 = arith.select %32, %245, %247 : vector<8x32xi1>, vector<8x32xf32>
    %249 = arith.mulf %248, %237 : vector<8x32xf32>
    %cst_78 = arith.constant 1.000000e+00 : f32
    %250 = vector.broadcast %cst_78 : f32 to vector<8x32xf32>
    %251 = arith.subf %250, %248 : vector<8x32xf32>
    %252 = arith.mulf %251, %194 : vector<8x32xf32>
    %253 = arith.addf %249, %252 : vector<8x32xf32>
    %254 = arith.mulf %248, %235 : vector<8x32xf32>
    %cst_79 = arith.constant 1.000000e+00 : f32
    %255 = vector.broadcast %cst_79 : f32 to vector<8x32xf32>
    %256 = arith.subf %255, %248 : vector<8x32xf32>
    %257 = arith.mulf %256, %199 : vector<8x32xf32>
    %258 = arith.addf %254, %257 : vector<8x32xf32>
    %259 = arith.mulf %248, %237 : vector<8x32xf32>
    %260 = vector.extract_strided_slice %259 {offsets = [0, 0], sizes = [8, 16], strides = [1, 1]} : vector<8x32xf32> to vector<8x16xf32>
    %261 = arith.index_cast %c3_i32 : i32 to index
    %c0_80 = arith.constant 0 : index
    %c0_81 = arith.constant 0 : index
    %262 = vector.load %arg17[%261, %c0_80, %c0_81] : memref<8x8x32xf32, #tpu.memory_space<vmem>>, vector<1x8x16xf32>
    %263 = vector.shape_cast %262 : vector<1x8x16xf32> to vector<8x16xf32>
    %264 = vector.shape_cast %260 : vector<8x16xf32> to vector<1x8x16xf32>
    tpu.vector_store %arg17[%261, %c0_80, %c0_81], %264 {strides = array<i32>} : memref<8x8x32xf32, #tpu.memory_space<vmem>>, vector<1x8x16xf32>,
    %265 = vector.extract_strided_slice %259 {offsets = [0, 16], sizes = [8, 16], strides = [1, 1]} : vector<8x32xf32> to vector<8x16xf32>
    %266 = arith.index_cast %211 : i32 to index
    %c0_82 = arith.constant 0 : index
    %c16_83 = arith.constant 16 : index
    %267 = vector.load %arg17[%266, %c0_82, %c16_83] : memref<8x8x32xf32, #tpu.memory_space<vmem>>, vector<1x8x16xf32>
    %268 = vector.shape_cast %267 : vector<1x8x16xf32> to vector<8x16xf32>
    %269 = vector.shape_cast %265 : vector<8x16xf32> to vector<1x8x16xf32>
    tpu.vector_store %arg17[%266, %c0_82, %c16_83], %269 {strides = array<i32>} : memref<8x8x32xf32, #tpu.memory_space<vmem>>, vector<1x8x16xf32>,
    %c4_i32 = arith.constant 4 : i32
    %c7_i32_84 = arith.constant 7 : i32
    %270 = arith.subi %c7_i32_84, %c4_i32 : i32
    %271 = arith.index_cast %c4_i32 : i32 to index
    %c0_85 = arith.constant 0 : index
    %c0_86 = arith.constant 0 : index
    %272 = vector.load %arg16[%271, %c0_85, %c0_86] : memref<8x8x128xf32, #tpu.memory_space<vmem>>, vector<1x8x128xf32>
    %273 = vector.shape_cast %272 : vector<1x8x128xf32> to vector<8x128xf32>
    %274 = arith.index_cast %270 : i32 to index
    %c0_87 = arith.constant 0 : index
    %c0_88 = arith.constant 0 : index
    %275 = vector.load %arg16[%274, %c0_87, %c0_88] : memref<8x8x128xf32, #tpu.memory_space<vmem>>, vector<1x8x128xf32>
    %276 = vector.shape_cast %275 : vector<1x8x128xf32> to vector<8x128xf32>
    %277 = arith.select %29, %273, %276 : vector<8x128xi1>, vector<8x128xf32>
    %278 = arith.truncf %253 : vector<8x32xf32> to vector<8x32xbf16>
    %cst_89 = arith.constant dense<0.000000e+00> : vector<8x128xf32>
    %279 = tpu.matmul %278, %10, %cst_89 {dimension_numbers = #tpu.dot_dimension_numbers<[1], [0], [0], [1], [0, 0, 1, 1], [], []>} : vector<8x32xbf16>, vector<32x128xbf16>, vector<8x128xf32> -> vector<8x128xf32>
    %280 = arith.addf %277, %279 : vector<8x128xf32>
    %281 = vector.extract_strided_slice %280 {offsets = [0, 0], sizes = [8, 96], strides = [1, 1]} : vector<8x128xf32> to vector<8x96xf32>
    %282 = arith.negf %281 : vector<8x96xf32>
    %283 = math.exp %282 : vector<8x96xf32>
    %cst_90 = arith.constant 1.000000e+00 : f32
    %284 = vector.broadcast %cst_90 : f32 to vector<8x96xf32>
    %285 = arith.addf %284, %283 : vector<8x96xf32>
    %286 = arith.divf %284, %285 : vector<8x96xf32>
    %287 = vector.extract_strided_slice %286 {offsets = [0, 0], sizes = [8, 32], strides = [1, 1]} : vector<8x96xf32> to vector<8x32xf32>
    %288 = vector.extract_strided_slice %286 {offsets = [0, 32], sizes = [8, 32], strides = [1, 1]} : vector<8x96xf32> to vector<8x32xf32>
    %289 = vector.extract_strided_slice %286 {offsets = [0, 64], sizes = [8, 32], strides = [1, 1]} : vector<8x96xf32> to vector<8x32xf32>
    %290 = vector.extract_strided_slice %280 {offsets = [0, 96], sizes = [8, 32], strides = [1, 1]} : vector<8x128xf32> to vector<8x32xf32>
    %291 = math.tanh %290 : vector<8x32xf32>
    %292 = arith.mulf %288, %258 : vector<8x32xf32>
    %293 = arith.mulf %287, %291 : vector<8x32xf32>
    %294 = arith.addf %292, %293 : vector<8x32xf32>
    %295 = math.tanh %294 : vector<8x32xf32>
    %296 = arith.mulf %289, %295 : vector<8x32xf32>
    %297 = arith.index_cast %c4_i32 : i32 to index
    %c0_91 = arith.constant 0 : index
    %c0_92 = arith.constant 0 : index
    %298 = vector.load %arg2[%297, %c0_91, %c0_92] : memref<8x8x1xf32, #tpu.memory_space<vmem>>, vector<1x8x1xf32>
    %299 = vector.shape_cast %298 : vector<1x8x1xf32> to vector<8x1xf32>
    %300 = arith.index_cast %270 : i32 to index
    %c0_93 = arith.constant 0 : index
    %c0_94 = arith.constant 0 : index
    %301 = vector.load %arg2[%300, %c0_93, %c0_94] : memref<8x8x1xf32, #tpu.memory_space<vmem>>, vector<1x8x1xf32>
    %302 = vector.shape_cast %301 : vector<1x8x1xf32> to vector<8x1xf32>
    %303 = vector.shape_cast %299 : vector<8x1xf32> to vector<8x1xf32>
    %304 = vector.broadcast %303 : vector<8x1xf32> to vector<8x32xf32>
    %305 = vector.shape_cast %302 : vector<8x1xf32> to vector<8x1xf32>
    %306 = vector.broadcast %305 : vector<8x1xf32> to vector<8x32xf32>
    %307 = arith.select %32, %304, %306 : vector<8x32xi1>, vector<8x32xf32>
    %308 = arith.mulf %307, %296 : vector<8x32xf32>
    %cst_95 = arith.constant 1.000000e+00 : f32
    %309 = vector.broadcast %cst_95 : f32 to vector<8x32xf32>
    %310 = arith.subf %309, %307 : vector<8x32xf32>
    %311 = arith.mulf %310, %253 : vector<8x32xf32>
    %312 = arith.addf %308, %311 : vector<8x32xf32>
    %313 = arith.mulf %307, %294 : vector<8x32xf32>
    %cst_96 = arith.constant 1.000000e+00 : f32
    %314 = vector.broadcast %cst_96 : f32 to vector<8x32xf32>
    %315 = arith.subf %314, %307 : vector<8x32xf32>
    %316 = arith.mulf %315, %258 : vector<8x32xf32>
    %317 = arith.addf %313, %316 : vector<8x32xf32>
    %318 = arith.mulf %307, %296 : vector<8x32xf32>
    %319 = vector.extract_strided_slice %318 {offsets = [0, 0], sizes = [8, 16], strides = [1, 1]} : vector<8x32xf32> to vector<8x16xf32>
    %320 = arith.index_cast %c4_i32 : i32 to index
    %c0_97 = arith.constant 0 : index
    %c0_98 = arith.constant 0 : index
    %321 = vector.load %arg17[%320, %c0_97, %c0_98] : memref<8x8x32xf32, #tpu.memory_space<vmem>>, vector<1x8x16xf32>
    %322 = vector.shape_cast %321 : vector<1x8x16xf32> to vector<8x16xf32>
    %323 = vector.shape_cast %319 : vector<8x16xf32> to vector<1x8x16xf32>
    tpu.vector_store %arg17[%320, %c0_97, %c0_98], %323 {strides = array<i32>} : memref<8x8x32xf32, #tpu.memory_space<vmem>>, vector<1x8x16xf32>,
    %324 = vector.extract_strided_slice %318 {offsets = [0, 16], sizes = [8, 16], strides = [1, 1]} : vector<8x32xf32> to vector<8x16xf32>
    %325 = arith.index_cast %270 : i32 to index
    %c0_99 = arith.constant 0 : index
    %c16_100 = arith.constant 16 : index
    %326 = vector.load %arg17[%325, %c0_99, %c16_100] : memref<8x8x32xf32, #tpu.memory_space<vmem>>, vector<1x8x16xf32>
    %327 = vector.shape_cast %326 : vector<1x8x16xf32> to vector<8x16xf32>
    %328 = vector.shape_cast %324 : vector<8x16xf32> to vector<1x8x16xf32>
    tpu.vector_store %arg17[%325, %c0_99, %c16_100], %328 {strides = array<i32>} : memref<8x8x32xf32, #tpu.memory_space<vmem>>, vector<1x8x16xf32>,
    %c5_i32 = arith.constant 5 : i32
    %c7_i32_101 = arith.constant 7 : i32
    %329 = arith.subi %c7_i32_101, %c5_i32 : i32
    %330 = arith.index_cast %c5_i32 : i32 to index
    %c0_102 = arith.constant 0 : index
    %c0_103 = arith.constant 0 : index
    %331 = vector.load %arg16[%330, %c0_102, %c0_103] : memref<8x8x128xf32, #tpu.memory_space<vmem>>, vector<1x8x128xf32>
    %332 = vector.shape_cast %331 : vector<1x8x128xf32> to vector<8x128xf32>
    %333 = arith.index_cast %329 : i32 to index
    %c0_104 = arith.constant 0 : index
    %c0_105 = arith.constant 0 : index
    %334 = vector.load %arg16[%333, %c0_104, %c0_105] : memref<8x8x128xf32, #tpu.memory_space<vmem>>, vector<1x8x128xf32>
    %335 = vector.shape_cast %334 : vector<1x8x128xf32> to vector<8x128xf32>
    %336 = arith.select %29, %332, %335 : vector<8x128xi1>, vector<8x128xf32>
    %337 = arith.truncf %312 : vector<8x32xf32> to vector<8x32xbf16>
    %cst_106 = arith.constant dense<0.000000e+00> : vector<8x128xf32>
    %338 = tpu.matmul %337, %10, %cst_106 {dimension_numbers = #tpu.dot_dimension_numbers<[1], [0], [0], [1], [0, 0, 1, 1], [], []>} : vector<8x32xbf16>, vector<32x128xbf16>, vector<8x128xf32> -> vector<8x128xf32>
    %339 = arith.addf %336, %338 : vector<8x128xf32>
    %340 = vector.extract_strided_slice %339 {offsets = [0, 0], sizes = [8, 96], strides = [1, 1]} : vector<8x128xf32> to vector<8x96xf32>
    %341 = arith.negf %340 : vector<8x96xf32>
    %342 = math.exp %341 : vector<8x96xf32>
    %cst_107 = arith.constant 1.000000e+00 : f32
    %343 = vector.broadcast %cst_107 : f32 to vector<8x96xf32>
    %344 = arith.addf %343, %342 : vector<8x96xf32>
    %345 = arith.divf %343, %344 : vector<8x96xf32>
    %346 = vector.extract_strided_slice %345 {offsets = [0, 0], sizes = [8, 32], strides = [1, 1]} : vector<8x96xf32> to vector<8x32xf32>
    %347 = vector.extract_strided_slice %345 {offsets = [0, 32], sizes = [8, 32], strides = [1, 1]} : vector<8x96xf32> to vector<8x32xf32>
    %348 = vector.extract_strided_slice %345 {offsets = [0, 64], sizes = [8, 32], strides = [1, 1]} : vector<8x96xf32> to vector<8x32xf32>
    %349 = vector.extract_strided_slice %339 {offsets = [0, 96], sizes = [8, 32], strides = [1, 1]} : vector<8x128xf32> to vector<8x32xf32>
    %350 = math.tanh %349 : vector<8x32xf32>
    %351 = arith.mulf %347, %317 : vector<8x32xf32>
    %352 = arith.mulf %346, %350 : vector<8x32xf32>
    %353 = arith.addf %351, %352 : vector<8x32xf32>
    %354 = math.tanh %353 : vector<8x32xf32>
    %355 = arith.mulf %348, %354 : vector<8x32xf32>
    %356 = arith.index_cast %c5_i32 : i32 to index
    %c0_108 = arith.constant 0 : index
    %c0_109 = arith.constant 0 : index
    %357 = vector.load %arg2[%356, %c0_108, %c0_109] : memref<8x8x1xf32, #tpu.memory_space<vmem>>, vector<1x8x1xf32>
    %358 = vector.shape_cast %357 : vector<1x8x1xf32> to vector<8x1xf32>
    %359 = arith.index_cast %329 : i32 to index
    %c0_110 = arith.constant 0 : index
    %c0_111 = arith.constant 0 : index
    %360 = vector.load %arg2[%359, %c0_110, %c0_111] : memref<8x8x1xf32, #tpu.memory_space<vmem>>, vector<1x8x1xf32>
    %361 = vector.shape_cast %360 : vector<1x8x1xf32> to vector<8x1xf32>
    %362 = vector.shape_cast %358 : vector<8x1xf32> to vector<8x1xf32>
    %363 = vector.broadcast %362 : vector<8x1xf32> to vector<8x32xf32>
    %364 = vector.shape_cast %361 : vector<8x1xf32> to vector<8x1xf32>
    %365 = vector.broadcast %364 : vector<8x1xf32> to vector<8x32xf32>
    %366 = arith.select %32, %363, %365 : vector<8x32xi1>, vector<8x32xf32>
    %367 = arith.mulf %366, %355 : vector<8x32xf32>
    %cst_112 = arith.constant 1.000000e+00 : f32
    %368 = vector.broadcast %cst_112 : f32 to vector<8x32xf32>
    %369 = arith.subf %368, %366 : vector<8x32xf32>
    %370 = arith.mulf %369, %312 : vector<8x32xf32>
    %371 = arith.addf %367, %370 : vector<8x32xf32>
    %372 = arith.mulf %366, %353 : vector<8x32xf32>
    %cst_113 = arith.constant 1.000000e+00 : f32
    %373 = vector.broadcast %cst_113 : f32 to vector<8x32xf32>
    %374 = arith.subf %373, %366 : vector<8x32xf32>
    %375 = arith.mulf %374, %317 : vector<8x32xf32>
    %376 = arith.addf %372, %375 : vector<8x32xf32>
    %377 = arith.mulf %366, %355 : vector<8x32xf32>
    %378 = vector.extract_strided_slice %377 {offsets = [0, 0], sizes = [8, 16], strides = [1, 1]} : vector<8x32xf32> to vector<8x16xf32>
    %379 = arith.index_cast %c5_i32 : i32 to index
    %c0_114 = arith.constant 0 : index
    %c0_115 = arith.constant 0 : index
    %380 = vector.load %arg17[%379, %c0_114, %c0_115] : memref<8x8x32xf32, #tpu.memory_space<vmem>>, vector<1x8x16xf32>
    %381 = vector.shape_cast %380 : vector<1x8x16xf32> to vector<8x16xf32>
    %382 = vector.shape_cast %378 : vector<8x16xf32> to vector<1x8x16xf32>
    tpu.vector_store %arg17[%379, %c0_114, %c0_115], %382 {strides = array<i32>} : memref<8x8x32xf32, #tpu.memory_space<vmem>>, vector<1x8x16xf32>,
    %383 = vector.extract_strided_slice %377 {offsets = [0, 16], sizes = [8, 16], strides = [1, 1]} : vector<8x32xf32> to vector<8x16xf32>
    %384 = arith.index_cast %329 : i32 to index
    %c0_116 = arith.constant 0 : index
    %c16_117 = arith.constant 16 : index
    %385 = vector.load %arg17[%384, %c0_116, %c16_117] : memref<8x8x32xf32, #tpu.memory_space<vmem>>, vector<1x8x16xf32>
    %386 = vector.shape_cast %385 : vector<1x8x16xf32> to vector<8x16xf32>
    %387 = vector.shape_cast %383 : vector<8x16xf32> to vector<1x8x16xf32>
    tpu.vector_store %arg17[%384, %c0_116, %c16_117], %387 {strides = array<i32>} : memref<8x8x32xf32, #tpu.memory_space<vmem>>, vector<1x8x16xf32>,
    %c6_i32 = arith.constant 6 : i32
    %c7_i32_118 = arith.constant 7 : i32
    %388 = arith.subi %c7_i32_118, %c6_i32 : i32
    %389 = arith.index_cast %c6_i32 : i32 to index
    %c0_119 = arith.constant 0 : index
    %c0_120 = arith.constant 0 : index
    %390 = vector.load %arg16[%389, %c0_119, %c0_120] : memref<8x8x128xf32, #tpu.memory_space<vmem>>, vector<1x8x128xf32>
    %391 = vector.shape_cast %390 : vector<1x8x128xf32> to vector<8x128xf32>
    %392 = arith.index_cast %388 : i32 to index
    %c0_121 = arith.constant 0 : index
    %c0_122 = arith.constant 0 : index
    %393 = vector.load %arg16[%392, %c0_121, %c0_122] : memref<8x8x128xf32, #tpu.memory_space<vmem>>, vector<1x8x128xf32>
    %394 = vector.shape_cast %393 : vector<1x8x128xf32> to vector<8x128xf32>
    %395 = arith.select %29, %391, %394 : vector<8x128xi1>, vector<8x128xf32>
    %396 = arith.truncf %371 : vector<8x32xf32> to vector<8x32xbf16>
    %cst_123 = arith.constant dense<0.000000e+00> : vector<8x128xf32>
    %397 = tpu.matmul %396, %10, %cst_123 {dimension_numbers = #tpu.dot_dimension_numbers<[1], [0], [0], [1], [0, 0, 1, 1], [], []>} : vector<8x32xbf16>, vector<32x128xbf16>, vector<8x128xf32> -> vector<8x128xf32>
    %398 = arith.addf %395, %397 : vector<8x128xf32>
    %399 = vector.extract_strided_slice %398 {offsets = [0, 0], sizes = [8, 96], strides = [1, 1]} : vector<8x128xf32> to vector<8x96xf32>
    %400 = arith.negf %399 : vector<8x96xf32>
    %401 = math.exp %400 : vector<8x96xf32>
    %cst_124 = arith.constant 1.000000e+00 : f32
    %402 = vector.broadcast %cst_124 : f32 to vector<8x96xf32>
    %403 = arith.addf %402, %401 : vector<8x96xf32>
    %404 = arith.divf %402, %403 : vector<8x96xf32>
    %405 = vector.extract_strided_slice %404 {offsets = [0, 0], sizes = [8, 32], strides = [1, 1]} : vector<8x96xf32> to vector<8x32xf32>
    %406 = vector.extract_strided_slice %404 {offsets = [0, 32], sizes = [8, 32], strides = [1, 1]} : vector<8x96xf32> to vector<8x32xf32>
    %407 = vector.extract_strided_slice %404 {offsets = [0, 64], sizes = [8, 32], strides = [1, 1]} : vector<8x96xf32> to vector<8x32xf32>
    %408 = vector.extract_strided_slice %398 {offsets = [0, 96], sizes = [8, 32], strides = [1, 1]} : vector<8x128xf32> to vector<8x32xf32>
    %409 = math.tanh %408 : vector<8x32xf32>
    %410 = arith.mulf %406, %376 : vector<8x32xf32>
    %411 = arith.mulf %405, %409 : vector<8x32xf32>
    %412 = arith.addf %410, %411 : vector<8x32xf32>
    %413 = math.tanh %412 : vector<8x32xf32>
    %414 = arith.mulf %407, %413 : vector<8x32xf32>
    %415 = arith.index_cast %c6_i32 : i32 to index
    %c0_125 = arith.constant 0 : index
    %c0_126 = arith.constant 0 : index
    %416 = vector.load %arg2[%415, %c0_125, %c0_126] : memref<8x8x1xf32, #tpu.memory_space<vmem>>, vector<1x8x1xf32>
    %417 = vector.shape_cast %416 : vector<1x8x1xf32> to vector<8x1xf32>
    %418 = arith.index_cast %388 : i32 to index
    %c0_127 = arith.constant 0 : index
    %c0_128 = arith.constant 0 : index
    %419 = vector.load %arg2[%418, %c0_127, %c0_128] : memref<8x8x1xf32, #tpu.memory_space<vmem>>, vector<1x8x1xf32>
    %420 = vector.shape_cast %419 : vector<1x8x1xf32> to vector<8x1xf32>
    %421 = vector.shape_cast %417 : vector<8x1xf32> to vector<8x1xf32>
    %422 = vector.broadcast %421 : vector<8x1xf32> to vector<8x32xf32>
    %423 = vector.shape_cast %420 : vector<8x1xf32> to vector<8x1xf32>
    %424 = vector.broadcast %423 : vector<8x1xf32> to vector<8x32xf32>
    %425 = arith.select %32, %422, %424 : vector<8x32xi1>, vector<8x32xf32>
    %426 = arith.mulf %425, %414 : vector<8x32xf32>
    %cst_129 = arith.constant 1.000000e+00 : f32
    %427 = vector.broadcast %cst_129 : f32 to vector<8x32xf32>
    %428 = arith.subf %427, %425 : vector<8x32xf32>
    %429 = arith.mulf %428, %371 : vector<8x32xf32>
    %430 = arith.addf %426, %429 : vector<8x32xf32>
    %431 = arith.mulf %425, %412 : vector<8x32xf32>
    %cst_130 = arith.constant 1.000000e+00 : f32
    %432 = vector.broadcast %cst_130 : f32 to vector<8x32xf32>
    %433 = arith.subf %432, %425 : vector<8x32xf32>
    %434 = arith.mulf %433, %376 : vector<8x32xf32>
    %435 = arith.addf %431, %434 : vector<8x32xf32>
    %436 = arith.mulf %425, %414 : vector<8x32xf32>
    %437 = vector.extract_strided_slice %436 {offsets = [0, 0], sizes = [8, 16], strides = [1, 1]} : vector<8x32xf32> to vector<8x16xf32>
    %438 = arith.index_cast %c6_i32 : i32 to index
    %c0_131 = arith.constant 0 : index
    %c0_132 = arith.constant 0 : index
    %439 = vector.load %arg17[%438, %c0_131, %c0_132] : memref<8x8x32xf32, #tpu.memory_space<vmem>>, vector<1x8x16xf32>
    %440 = vector.shape_cast %439 : vector<1x8x16xf32> to vector<8x16xf32>
    %441 = vector.shape_cast %437 : vector<8x16xf32> to vector<1x8x16xf32>
    tpu.vector_store %arg17[%438, %c0_131, %c0_132], %441 {strides = array<i32>} : memref<8x8x32xf32, #tpu.memory_space<vmem>>, vector<1x8x16xf32>,
    %442 = vector.extract_strided_slice %436 {offsets = [0, 16], sizes = [8, 16], strides = [1, 1]} : vector<8x32xf32> to vector<8x16xf32>
    %443 = arith.index_cast %388 : i32 to index
    %c0_133 = arith.constant 0 : index
    %c16_134 = arith.constant 16 : index
    %444 = vector.load %arg17[%443, %c0_133, %c16_134] : memref<8x8x32xf32, #tpu.memory_space<vmem>>, vector<1x8x16xf32>
    %445 = vector.shape_cast %444 : vector<1x8x16xf32> to vector<8x16xf32>
    %446 = vector.shape_cast %442 : vector<8x16xf32> to vector<1x8x16xf32>
    tpu.vector_store %arg17[%443, %c0_133, %c16_134], %446 {strides = array<i32>} : memref<8x8x32xf32, #tpu.memory_space<vmem>>, vector<1x8x16xf32>,
    %c7_i32_135 = arith.constant 7 : i32
    %c7_i32_136 = arith.constant 7 : i32
    %447 = arith.subi %c7_i32_136, %c7_i32_135 : i32
    %448 = arith.index_cast %c7_i32_135 : i32 to index
    %c0_137 = arith.constant 0 : index
    %c0_138 = arith.constant 0 : index
    %449 = vector.load %arg16[%448, %c0_137, %c0_138] : memref<8x8x128xf32, #tpu.memory_space<vmem>>, vector<1x8x128xf32>
    %450 = vector.shape_cast %449 : vector<1x8x128xf32> to vector<8x128xf32>
    %451 = arith.index_cast %447 : i32 to index
    %c0_139 = arith.constant 0 : index
    %c0_140 = arith.constant 0 : index
    %452 = vector.load %arg16[%451, %c0_139, %c0_140] : memref<8x8x128xf32, #tpu.memory_space<vmem>>, vector<1x8x128xf32>
    %453 = vector.shape_cast %452 : vector<1x8x128xf32> to vector<8x128xf32>
    %454 = arith.select %29, %450, %453 : vector<8x128xi1>, vector<8x128xf32>
    %455 = arith.truncf %430 : vector<8x32xf32> to vector<8x32xbf16>
    %cst_141 = arith.constant dense<0.000000e+00> : vector<8x128xf32>
    %456 = tpu.matmul %455, %10, %cst_141 {dimension_numbers = #tpu.dot_dimension_numbers<[1], [0], [0], [1], [0, 0, 1, 1], [], []>} : vector<8x32xbf16>, vector<32x128xbf16>, vector<8x128xf32> -> vector<8x128xf32>
    %457 = arith.addf %454, %456 : vector<8x128xf32>
    %458 = vector.extract_strided_slice %457 {offsets = [0, 0], sizes = [8, 96], strides = [1, 1]} : vector<8x128xf32> to vector<8x96xf32>
    %459 = arith.negf %458 : vector<8x96xf32>
    %460 = math.exp %459 : vector<8x96xf32>
    %cst_142 = arith.constant 1.000000e+00 : f32
    %461 = vector.broadcast %cst_142 : f32 to vector<8x96xf32>
    %462 = arith.addf %461, %460 : vector<8x96xf32>
    %463 = arith.divf %461, %462 : vector<8x96xf32>
    %464 = vector.extract_strided_slice %463 {offsets = [0, 0], sizes = [8, 32], strides = [1, 1]} : vector<8x96xf32> to vector<8x32xf32>
    %465 = vector.extract_strided_slice %463 {offsets = [0, 32], sizes = [8, 32], strides = [1, 1]} : vector<8x96xf32> to vector<8x32xf32>
    %466 = vector.extract_strided_slice %463 {offsets = [0, 64], sizes = [8, 32], strides = [1, 1]} : vector<8x96xf32> to vector<8x32xf32>
    %467 = vector.extract_strided_slice %457 {offsets = [0, 96], sizes = [8, 32], strides = [1, 1]} : vector<8x128xf32> to vector<8x32xf32>
    %468 = math.tanh %467 : vector<8x32xf32>
    %469 = arith.mulf %465, %435 : vector<8x32xf32>
    %470 = arith.mulf %464, %468 : vector<8x32xf32>
    %471 = arith.addf %469, %470 : vector<8x32xf32>
    %472 = math.tanh %471 : vector<8x32xf32>
    %473 = arith.mulf %466, %472 : vector<8x32xf32>
    %474 = arith.index_cast %c7_i32_135 : i32 to index
    %c0_143 = arith.constant 0 : index
    %c0_144 = arith.constant 0 : index
    %475 = vector.load %arg2[%474, %c0_143, %c0_144] : memref<8x8x1xf32, #tpu.memory_space<vmem>>, vector<1x8x1xf32>
    %476 = vector.shape_cast %475 : vector<1x8x1xf32> to vector<8x1xf32>
    %477 = arith.index_cast %447 : i32 to index
    %c0_145 = arith.constant 0 : index
    %c0_146 = arith.constant 0 : index
    %478 = vector.load %arg2[%477, %c0_145, %c0_146] : memref<8x8x1xf32, #tpu.memory_space<vmem>>, vector<1x8x1xf32>
    %479 = vector.shape_cast %478 : vector<1x8x1xf32> to vector<8x1xf32>
    %480 = vector.shape_cast %476 : vector<8x1xf32> to vector<8x1xf32>
    %481 = vector.broadcast %480 : vector<8x1xf32> to vector<8x32xf32>
    %482 = vector.shape_cast %479 : vector<8x1xf32> to vector<8x1xf32>
    %483 = vector.broadcast %482 : vector<8x1xf32> to vector<8x32xf32>
    %484 = arith.select %32, %481, %483 : vector<8x32xi1>, vector<8x32xf32>
    %485 = arith.mulf %484, %473 : vector<8x32xf32>
    %cst_147 = arith.constant 1.000000e+00 : f32
    %486 = vector.broadcast %cst_147 : f32 to vector<8x32xf32>
    %487 = arith.subf %486, %484 : vector<8x32xf32>
    %488 = arith.mulf %487, %430 : vector<8x32xf32>
    %489 = arith.addf %485, %488 : vector<8x32xf32>
    %490 = arith.mulf %484, %471 : vector<8x32xf32>
    %cst_148 = arith.constant 1.000000e+00 : f32
    %491 = vector.broadcast %cst_148 : f32 to vector<8x32xf32>
    %492 = arith.subf %491, %484 : vector<8x32xf32>
    %493 = arith.mulf %492, %435 : vector<8x32xf32>
    %494 = arith.addf %490, %493 : vector<8x32xf32>
    %495 = arith.mulf %484, %473 : vector<8x32xf32>
    %496 = vector.extract_strided_slice %495 {offsets = [0, 0], sizes = [8, 16], strides = [1, 1]} : vector<8x32xf32> to vector<8x16xf32>
    %497 = arith.index_cast %c7_i32_135 : i32 to index
    %c0_149 = arith.constant 0 : index
    %c0_150 = arith.constant 0 : index
    %498 = vector.load %arg17[%497, %c0_149, %c0_150] : memref<8x8x32xf32, #tpu.memory_space<vmem>>, vector<1x8x16xf32>
    %499 = vector.shape_cast %498 : vector<1x8x16xf32> to vector<8x16xf32>
    %500 = vector.shape_cast %496 : vector<8x16xf32> to vector<1x8x16xf32>
    tpu.vector_store %arg17[%497, %c0_149, %c0_150], %500 {strides = array<i32>} : memref<8x8x32xf32, #tpu.memory_space<vmem>>, vector<1x8x16xf32>,
    %501 = vector.extract_strided_slice %495 {offsets = [0, 16], sizes = [8, 16], strides = [1, 1]} : vector<8x32xf32> to vector<8x16xf32>
    %502 = arith.index_cast %447 : i32 to index
    %c0_151 = arith.constant 0 : index
    %c16_152 = arith.constant 16 : index
    %503 = vector.load %arg17[%502, %c0_151, %c16_152] : memref<8x8x32xf32, #tpu.memory_space<vmem>>, vector<1x8x16xf32>
    %504 = vector.shape_cast %503 : vector<1x8x16xf32> to vector<8x16xf32>
    %505 = vector.shape_cast %501 : vector<8x16xf32> to vector<1x8x16xf32>
    tpu.vector_store %arg17[%502, %c0_151, %c16_152], %505 {strides = array<i32>} : memref<8x8x32xf32, #tpu.memory_space<vmem>>, vector<1x8x16xf32>,
    %c8_i32 = arith.constant 8 : i32
    %c0_153 = arith.constant 0 : index
    %c0_154 = arith.constant 0 : index
    %c0_155 = arith.constant 0 : index
    %506 = vector.load %arg17[%c0_153, %c0_154, %c0_155] : memref<8x8x32xf32, #tpu.memory_space<vmem>>, vector<8x8x32xf32>
    %507 = arith.truncf %506 : vector<8x8x32xf32> to vector<8x8x32xbf16>
    %c0_156 = arith.constant 0 : index
    %c0_157 = arith.constant 0 : index
    %508 = vector.load %arg3[%c0_156, %c0_157] : memref<8x16xbf16, #tpu.memory_space<vmem>>, vector<8x16xbf16>
    %509 = vector.shape_cast %507 : vector<8x8x32xbf16> to vector<64x32xbf16>
    %c0_158 = arith.constant 0 : index
    %c0_159 = arith.constant 0 : index
    %510 = vector.load %arg7[%c0_158, %c0_159] : memref<32x64xbf16, #tpu.memory_space<vmem>>, vector<32x64xbf16>
    %cst_160 = arith.constant dense<0.000000e+00> : vector<64x64xf32>
    %511 = tpu.matmul %509, %510, %cst_160 {dimension_numbers = #tpu.dot_dimension_numbers<[1], [0], [0], [1], [0, 0, 1, 1], [], []>} : vector<64x32xbf16>, vector<32x64xbf16>, vector<64x64xf32> -> vector<64x64xf32>
    %512 = vector.shape_cast %511 : vector<64x64xf32> to vector<8x8x64xf32>
    %513 = vector.extract_strided_slice %512 {offsets = [0, 0, 0], sizes = [8, 8, 32], strides = [1, 1, 1]} : vector<8x8x64xf32> to vector<8x8x32xf32>
    %514 = vector.extract_strided_slice %512 {offsets = [0, 0, 32], sizes = [8, 8, 32], strides = [1, 1, 1]} : vector<8x8x64xf32> to vector<8x8x32xf32>
    %c0_161 = arith.constant 0 : index
    %c0_162 = arith.constant 0 : index
    %515 = vector.load %arg8[%c0_161, %c0_162] : memref<16x32xbf16, #tpu.memory_space<vmem>>, vector<16x32xbf16>
    %cst_163 = arith.constant dense<0.000000e+00> : vector<8x32xf32>
    %516 = tpu.matmul %508, %515, %cst_163 {dimension_numbers = #tpu.dot_dimension_numbers<[1], [0], [0], [1], [0, 0, 1, 1], [], []>} : vector<8x16xbf16>, vector<16x32xbf16>, vector<8x32xf32> -> vector<8x32xf32>
    %517 = vector.shape_cast %516 : vector<8x32xf32> to vector<1x8x32xf32>
    %518 = vector.broadcast %517 : vector<1x8x32xf32> to vector<8x8x32xf32>
    %519 = arith.addf %513, %518 : vector<8x8x32xf32>
    %520 = math.tanh %519 : vector<8x8x32xf32>
    %c0_164 = arith.constant 0 : index
    %c0_165 = arith.constant 0 : index
    %521 = vector.load %arg9[%c0_164, %c0_165] : memref<1x32xf32, #tpu.memory_space<vmem>>, vector<1x32xf32>
    %522 = vector.shape_cast %521 : vector<1x32xf32> to vector<1x1x32xf32>
    %523 = vector.broadcast %522 : vector<1x1x32xf32> to vector<8x8x32xf32>
    %524 = arith.mulf %520, %523 : vector<8x8x32xf32>
    %cst_166 = arith.constant dense<0.000000e+00> : vector<8x8xf32>
    %525 = vector.multi_reduction <add>, %524, %cst_166 [2] : vector<8x8x32xf32> to vector<8x8xf32>
    %526 = vector.shape_cast %525 : vector<8x8xf32> to vector<8x8x1xf32>
    %c0_167 = arith.constant 0 : index
    %c0_168 = arith.constant 0 : index
    %c0_169 = arith.constant 0 : index
    %527 = vector.load %arg2[%c0_167, %c0_168, %c0_169] : memref<8x8x1xf32, #tpu.memory_space<vmem>>, vector<8x8x1xf32>
    %cst_170 = arith.constant 0.000000e+00 : f32
    %528 = vector.broadcast %cst_170 : f32 to vector<8x8x1xf32>
    %529 = arith.cmpf ogt, %527, %528 : vector<8x8x1xf32>
    %cst_171 = arith.constant -1.000000e+09 : f32
    %530 = vector.broadcast %cst_171 : f32 to vector<8x8x1xf32>
    %531 = arith.select %529, %526, %530 : vector<8x8x1xi1>, vector<8x8x1xf32>
    %cst_172 = arith.constant dense<0xFF800000> : vector<8x1xf32>
    %532 = vector.multi_reduction <maximumf>, %531, %cst_172 [0] : vector<8x8x1xf32> to vector<8x1xf32>
    %533 = vector.shape_cast %532 : vector<8x1xf32> to vector<1x8x1xf32>
    %534 = vector.broadcast %533 : vector<1x8x1xf32> to vector<8x8x1xf32>
    %535 = arith.subf %531, %534 : vector<8x8x1xf32>
    %536 = math.exp %535 : vector<8x8x1xf32>
    %537 = arith.mulf %536, %527 : vector<8x8x1xf32>
    %cst_173 = arith.constant dense<0.000000e+00> : vector<8x1xf32>
    %538 = vector.multi_reduction <add>, %537, %cst_173 [0] : vector<8x8x1xf32> to vector<8x1xf32>
    %539 = vector.shape_cast %538 : vector<8x1xf32> to vector<1x8x1xf32>
    %cst_174 = arith.constant 9.99999971E-10 : f32
    %540 = vector.broadcast %cst_174 : f32 to vector<1x8x1xf32>
    %541 = arith.addf %539, %540 : vector<1x8x1xf32>
    %542 = vector.broadcast %541 : vector<1x8x1xf32> to vector<8x8x1xf32>
    %543 = arith.divf %537, %542 : vector<8x8x1xf32>
    %544 = vector.broadcast %543 : vector<8x8x1xf32> to vector<8x8x32xf32>
    %545 = arith.mulf %544, %506 : vector<8x8x32xf32>
    %cst_175 = arith.constant dense<0.000000e+00> : vector<8x32xf32>
    %546 = vector.multi_reduction <add>, %545, %cst_175 [0] : vector<8x8x32xf32> to vector<8x32xf32>
    %c0_176 = arith.constant 0 : index
    %c0_177 = arith.constant 0 : index
    %547 = vector.load %arg10[%c0_176, %c0_177] : memref<16x32xbf16, #tpu.memory_space<vmem>>, vector<16x32xbf16>
    %cst_178 = arith.constant dense<0.000000e+00> : vector<8x32xf32>
    %548 = tpu.matmul %508, %547, %cst_178 {dimension_numbers = #tpu.dot_dimension_numbers<[1], [0], [0], [1], [0, 0, 1, 1], [], []>} : vector<8x16xbf16>, vector<16x32xbf16>, vector<8x32xf32> -> vector<8x32xf32>
    %549 = arith.truncf %546 : vector<8x32xf32> to vector<8x32xbf16>
    %c0_179 = arith.constant 0 : index
    %c0_180 = arith.constant 0 : index
    %550 = vector.load %arg11[%c0_179, %c0_180] : memref<32x32xbf16, #tpu.memory_space<vmem>>, vector<32x32xbf16>
    %cst_181 = arith.constant dense<0.000000e+00> : vector<8x32xf32>
    %551 = tpu.matmul %549, %550, %cst_181 {dimension_numbers = #tpu.dot_dimension_numbers<[1], [0], [0], [1], [0, 0, 1, 1], [], []>} : vector<8x32xbf16>, vector<32x32xbf16>, vector<8x32xf32> -> vector<8x32xf32>
    %552 = arith.addf %548, %551 : vector<8x32xf32>
    %c0_182 = arith.constant 0 : index
    %c0_183 = arith.constant 0 : index
    %553 = vector.load %arg12[%c0_182, %c0_183] : memref<1x32xf32, #tpu.memory_space<vmem>>, vector<1x32xf32>
    %554 = vector.broadcast %553 : vector<1x32xf32> to vector<8x32xf32>
    %555 = arith.addf %552, %554 : vector<8x32xf32>
    %556 = vector.shape_cast %555 : vector<8x32xf32> to vector<1x8x32xf32>
    %557 = vector.broadcast %556 : vector<1x8x32xf32> to vector<8x8x32xf32>
    %558 = arith.addf %514, %557 : vector<8x8x32xf32>
    %559 = math.tanh %558 : vector<8x8x32xf32>
    %560 = arith.truncf %559 : vector<8x8x32xf32> to vector<8x8x32xbf16>
    %561 = vector.shape_cast %560 : vector<8x8x32xbf16> to vector<64x32xbf16>
    %c0_184 = arith.constant 0 : index
    %c0_185 = arith.constant 0 : index
    %562 = vector.load %arg13[%c0_184, %c0_185] : memref<32x128xbf16, #tpu.memory_space<vmem>>, vector<32x128xbf16>
    %cst_186 = arith.constant dense<0.000000e+00> : vector<64x128xf32>
    %563 = tpu.matmul %561, %562, %cst_186 {dimension_numbers = #tpu.dot_dimension_numbers<[1], [0], [0], [1], [0, 0, 1, 1], [], []>} : vector<64x32xbf16>, vector<32x128xbf16>, vector<64x128xf32> -> vector<64x128xf32>
    %564 = vector.shape_cast %563 : vector<64x128xf32> to vector<8x8x128xf32>
    %c0_187 = arith.constant 0 : index
    %c0_188 = arith.constant 0 : index
    %565 = vector.load %arg14[%c0_187, %c0_188] : memref<1x128xf32, #tpu.memory_space<vmem>>, vector<1x128xf32>
    %566 = vector.shape_cast %565 : vector<1x128xf32> to vector<1x1x128xf32>
    %567 = vector.broadcast %566 : vector<1x1x128xf32> to vector<8x8x128xf32>
    %568 = arith.addf %564, %567 : vector<8x8x128xf32>
    %c0_189 = arith.constant 0 : index
    %c0_190 = arith.constant 0 : index
    %c0_191 = arith.constant 0 : index
    %569 = vector.load %arg15[%c0_189, %c0_190, %c0_191] : memref<8x8x128xf32, #tpu.memory_space<vmem>>, vector<8x8x128xf32>
    tpu.vector_store %arg15[%c0_189, %c0_190, %c0_191], %568 {strides = array<i32>} : memref<8x8x128xf32, #tpu.memory_space<vmem>>, vector<8x8x128xf32>,
    return
  }
  func.func @transform_0(%arg0: i32) -> (i32, i32, i32) {
    %c0_i32 = arith.constant 0 : i32
    %c0_i32_0 = arith.constant 0 : i32
    %c0_i32_1 = arith.constant 0 : i32
    return %c0_i32, %arg0, %c0_i32_0 : i32, i32, i32
  }
  func.func @transform_1(%arg0: i32) -> (i32, i32, i32) {
    %c0_i32 = arith.constant 0 : i32
    %c0_i32_0 = arith.constant 0 : i32
    %c0_i32_1 = arith.constant 0 : i32
    return %c0_i32, %arg0, %c0_i32_0 : i32, i32, i32
  }
  func.func @transform_2(%arg0: i32) -> (i32, i32) {
    %c0_i32 = arith.constant 0 : i32
    %c0_i32_0 = arith.constant 0 : i32
    return %arg0, %c0_i32 : i32, i32
  }
  func.func @transform_3(%arg0: i32) -> (i32, i32) {
    %c0_i32 = arith.constant 0 : i32
    %c0_i32_0 = arith.constant 0 : i32
    %c0_i32_1 = arith.constant 0 : i32
    return %c0_i32, %c0_i32_0 : i32, i32
  }
  func.func @transform_4(%arg0: i32) -> (i32, i32) {
    %c0_i32 = arith.constant 0 : i32
    %c0_i32_0 = arith.constant 0 : i32
    %c0_i32_1 = arith.constant 0 : i32
    return %c0_i32, %c0_i32_0 : i32, i32
  }
  func.func @transform_5(%arg0: i32) -> (i32, i32) {
    %c0_i32 = arith.constant 0 : i32
    %c0_i32_0 = arith.constant 0 : i32
    %c0_i32_1 = arith.constant 0 : i32
    return %c0_i32, %c0_i32_0 : i32, i32
  }
  func.func @transform_6(%arg0: i32) -> (i32, i32) {
    %c0_i32 = arith.constant 0 : i32
    %c0_i32_0 = arith.constant 0 : i32
    %c0_i32_1 = arith.constant 0 : i32
    return %c0_i32, %c0_i32_0 : i32, i32
  }
  func.func @transform_7(%arg0: i32) -> (i32, i32) {
    %c0_i32 = arith.constant 0 : i32
    %c0_i32_0 = arith.constant 0 : i32
    %c0_i32_1 = arith.constant 0 : i32
    return %c0_i32, %c0_i32_0 : i32, i32
  }
  func.func @transform_8(%arg0: i32) -> (i32, i32) {
    %c0_i32 = arith.constant 0 : i32
    %c0_i32_0 = arith.constant 0 : i32
    %c0_i32_1 = arith.constant 0 : i32
    return %c0_i32, %c0_i32_0 : i32, i32
  }
  func.func @transform_9(%arg0: i32) -> (i32, i32) {
    %c0_i32 = arith.constant 0 : i32
    %c0_i32_0 = arith.constant 0 : i32
    %c0_i32_1 = arith.constant 0 : i32
    return %c0_i32, %c0_i32_0 : i32, i32
  }
  func.func @transform_10(%arg0: i32) -> (i32, i32) {
    %c0_i32 = arith.constant 0 : i32
    %c0_i32_0 = arith.constant 0 : i32
    %c0_i32_1 = arith.constant 0 : i32
    return %c0_i32, %c0_i32_0 : i32, i32
  }
  func.func @transform_11(%arg0: i32) -> (i32, i32) {
    %c0_i32 = arith.constant 0 : i32
    %c0_i32_0 = arith.constant 0 : i32
    %c0_i32_1 = arith.constant 0 : i32
    return %c0_i32, %c0_i32_0 : i32, i32
  }
  func.func @transform_12(%arg0: i32) -> (i32, i32) {
    %c0_i32 = arith.constant 0 : i32
    %c0_i32_0 = arith.constant 0 : i32
    %c0_i32_1 = arith.constant 0 : i32
    return %c0_i32, %c0_i32_0 : i32, i32
  }
  func.func @transform_13(%arg0: i32) -> (i32, i32) {
    %c0_i32 = arith.constant 0 : i32
    %c0_i32_0 = arith.constant 0 : i32
    %c0_i32_1 = arith.constant 0 : i32
    return %c0_i32, %c0_i32_0 : i32, i32
  }
  func.func @transform_14(%arg0: i32) -> (i32, i32, i32) {
    %c0_i32 = arith.constant 0 : i32
    %c0_i32_0 = arith.constant 0 : i32
    %c0_i32_1 = arith.constant 0 : i32
    return %c0_i32, %arg0, %c0_i32_0 : i32, i32, i32
  }
}

</mosaic_0001>

<llo_original>
// kernel: rel_based_labeling_forward.1
$region0: #{rel_based_labeling_forward.1}
  #allocation0 [shape = 'u32[]', space=smem, size = 0x4, offset = 0x4, fixed_abs, tag = 'smem constant byte address 0x4 - core index']
  #allocation1 [shape = 'u32[144,128]{1,0:T(1,128)}', space=vmem, size = 0x12000, scoped, tag = 'internal scratch']
  #allocation2 [shape = 'f32[8,8,128]{2,1,0:T(8,128)}', space=vmem, size = 0x8000, scoped, tag = 'scratch operand']
  #allocation3 [shape = 'f32[8,8,32]{2,1,0:T(8,128)}', space=vmem, size = 0x8000, scoped, tag = 'scratch operand']
  %s0 = inlined_call_operand.vmem [shape: bf16[8,8,32], index: 0, kind: input, shape index: {}]
  %s1 = inlined_call_operand.vmem [shape: f32[8,8,1], index: 1, kind: input, shape index: {}]
  %s2 = inlined_call_operand.vmem [shape: bf16[8,16], index: 2, kind: input, shape index: {}]
  %s3 = inlined_call_operand.vmem [shape: bf16[32,128], index: 3, kind: input, shape index: {}]
  %s4 = inlined_call_operand.vmem [shape: bf16[32,128], index: 4, kind: input, shape index: {}]
  %s5 = inlined_call_operand.vmem [shape: f32[1,128], index: 5, kind: input, shape index: {}]
  %s6 = inlined_call_operand.vmem [shape: bf16[32,64], index: 6, kind: input, shape index: {}]
  %s7 = inlined_call_operand.vmem [shape: bf16[16,32], index: 7, kind: input, shape index: {}]
  %s8 = inlined_call_operand.vmem [shape: f32[1,32], index: 8, kind: input, shape index: {}]
  %s9 = inlined_call_operand.vmem [shape: bf16[16,32], index: 9, kind: input, shape index: {}]
  %s10 = inlined_call_operand.vmem [shape: bf16[32,32], index: 10, kind: input, shape index: {}]
  %s11 = inlined_call_operand.vmem [shape: f32[1,32], index: 11, kind: input, shape index: {}]
  %s12 = inlined_call_operand.vmem [shape: bf16[32,128], index: 12, kind: input, shape index: {}]
  %s13 = inlined_call_operand.vmem [shape: f32[1,128], index: 13, kind: input, shape index: {}]
  %s14 = inlined_call_operand.vmem [shape: f32[8,8,128], index: 14, kind: output, shape index: {}]
  %s15 = sld [smem:[#allocation0]]
  $region66: #{rel_based_labeling_forward.1} parent=0
    _
  %s17 = ssub.s32 1, %s15
  %s18 = scalar_select 0, %s17, %s15
  // Predicated region
  $region2: #{rel_based_labeling_forward.1} parent=0 // pred_check
    _
  $region3: #{rel_based_labeling_forward.1} parent=0 // pred_check_branch
    %20 = sbr.rel (0) target = $region5
  $region4: #{rel_based_labeling_forward.1} parent=0 // pred_region
    _
  $region5: #{rel_based_labeling_forward.1} parent=0 // pred_fallthru
    _
  // Predicated region
  $region6: #{rel_based_labeling_forward.1} parent=0 // pred_check
    _
  $region7: #{rel_based_labeling_forward.1} parent=0 // pred_check_branch
    %22 = sbr.rel (0) target = $region9
  $region8: #{rel_based_labeling_forward.1} parent=0 // pred_region
    _
  $region9: #{rel_based_labeling_forward.1} parent=0 // pred_fallthru
    _
  // Predicated region
  $region10: #{rel_based_labeling_forward.1} parent=0 // pred_check
    _
  $region11: #{rel_based_labeling_forward.1} parent=0 // pred_check_branch
    %24 = sbr.rel (0) target = $region13
  $region12: #{rel_based_labeling_forward.1} parent=0 // pred_region
    _
  $region13: #{rel_based_labeling_forward.1} parent=0 // pred_fallthru
    _
  // Predicated region
  $region14: #{rel_based_labeling_forward.1} parent=0 // pred_check
    _
  $region15: #{rel_based_labeling_forward.1} parent=0 // pred_check_branch
    %26 = sbr.rel (0) target = $region17
  $region16: #{rel_based_labeling_forward.1} parent=0 // pred_region
    _
  $region17: #{rel_based_labeling_forward.1} parent=0 // pred_fallthru
    _
  // Predicated region
  $region18: #{rel_based_labeling_forward.1} parent=0 // pred_check
    _
  $region19: #{rel_based_labeling_forward.1} parent=0 // pred_check_branch
    %28 = sbr.rel (0) target = $region21
  $region20: #{rel_based_labeling_forward.1} parent=0 // pred_region
    _
  $region21: #{rel_based_labeling_forward.1} parent=0 // pred_fallthru
    _
  // Predicated region
  $region22: #{rel_based_labeling_forward.1} parent=0 // pred_check
    _
  $region23: #{rel_based_labeling_forward.1} parent=0 // pred_check_branch
    %30 = sbr.rel (0) target = $region25
  $region24: #{rel_based_labeling_forward.1} parent=0 // pred_region
    _
  $region25: #{rel_based_labeling_forward.1} parent=0 // pred_fallthru
    _
  // Predicated region
  $region26: #{rel_based_labeling_forward.1} parent=0 // pred_check
    _
  $region27: #{rel_based_labeling_forward.1} parent=0 // pred_check_branch
    %32 = sbr.rel (0) target = $region29
  $region28: #{rel_based_labeling_forward.1} parent=0 // pred_region
    _
  $region29: #{rel_based_labeling_forward.1} parent=0 // pred_fallthru
    _
  // Predicated region
  $region30: #{rel_based_labeling_forward.1} parent=0 // pred_check
    _
  $region31: #{rel_based_labeling_forward.1} parent=0 // pred_check_branch
    %34 = sbr.rel (0) target = $region33
  $region32: #{rel_based_labeling_forward.1} parent=0 // pred_region
    _
  $region33: #{rel_based_labeling_forward.1} parent=0 // pred_fallthru
    _
  // Predicated region
  $region34: #{rel_based_labeling_forward.1} parent=0 // pred_check
    _
  $region35: #{rel_based_labeling_forward.1} parent=0 // pred_check_branch
    %36 = sbr.rel (0) target = $region37
  $region36: #{rel_based_labeling_forward.1} parent=0 // pred_region
    _
  $region37: #{rel_based_labeling_forward.1} parent=0 // pred_fallthru
    _
  // Predicated region
  $region38: #{rel_based_labeling_forward.1} parent=0 // pred_check
    _
  $region39: #{rel_based_labeling_forward.1} parent=0 // pred_check_branch
    %38 = sbr.rel (0) target = $region41
  $region40: #{rel_based_labeling_forward.1} parent=0 // pred_region
    _
  $region41: #{rel_based_labeling_forward.1} parent=0 // pred_fallthru
    _
  // Predicated region
  $region42: #{rel_based_labeling_forward.1} parent=0 // pred_check
    _
  $region43: #{rel_based_labeling_forward.1} parent=0 // pred_check_branch
    %40 = sbr.rel (0) target = $region45
  $region44: #{rel_based_labeling_forward.1} parent=0 // pred_region
    _
  $region45: #{rel_based_labeling_forward.1} parent=0 // pred_fallthru
    _
  // Predicated region
  $region46: #{rel_based_labeling_forward.1} parent=0 // pred_check
    _
  $region47: #{rel_based_labeling_forward.1} parent=0 // pred_check_branch
    %42 = sbr.rel (0) target = $region49
  $region48: #{rel_based_labeling_forward.1} parent=0 // pred_region
    _
  $region49: #{rel_based_labeling_forward.1} parent=0 // pred_fallthru
    _
  // Predicated region
  $region50: #{rel_based_labeling_forward.1} parent=0 // pred_check
    _
  $region51: #{rel_based_labeling_forward.1} parent=0 // pred_check_branch
    %44 = sbr.rel (0) target = $region53
  $region52: #{rel_based_labeling_forward.1} parent=0 // pred_region
    _
  $region53: #{rel_based_labeling_forward.1} parent=0 // pred_fallthru
    _
  // Predicated region
  $region54: #{rel_based_labeling_forward.1} parent=0 // pred_check
    _
  $region55: #{rel_based_labeling_forward.1} parent=0 // pred_check_branch
    %46 = sbr.rel (0) target = $region57
  $region56: #{rel_based_labeling_forward.1} parent=0 // pred_region
    _
  $region57: #{rel_based_labeling_forward.1} parent=0 // pred_fallthru
    _
  %v48 = vld [vmem:[%s0] sm:$0xf]
  %v49 = vld [vmem:[%s0 + $0x4] sm:$0xf]
  %v50 = vld [vmem:[%s0 + $0x8] sm:$0xf]
  %v51 = vld [vmem:[%s0 + $0xc] sm:$0xf]
  %v52 = vld [vmem:[%s0 + $0x10] sm:$0xf]
  %v53 = vld [vmem:[%s0 + $0x14] sm:$0xf]
  %v54 = vld [vmem:[%s0 + $0x18] sm:$0xf]
  %v55 = vld [vmem:[%s0 + $0x1c] sm:$0xf]
  %v56 = vld [vmem:[%s3] sm:$0xf]
  %v57 = vld [vmem:[%s3 + $0x4] sm:$0xf]
  %v58 = vld [vmem:[%s3 + $0x8] sm:$0xf]
  %v59 = vld [vmem:[%s3 + $0xc] sm:$0xf]
  %v68 = vunpack.c.l.b16 %v48
  %v69 = vunpack.c.l.b16 %v49
  %v70 = vunpack.c.l.b16 %v50
  %v71 = vunpack.c.l.b16 %v51
  %v72 = vunpack.c.l.b16 %v52
  %v73 = vunpack.c.l.b16 %v53
  %v74 = vunpack.c.l.b16 %v54
  %v75 = vunpack.c.l.b16 %v55
  %v76 = vpack.c.b16 %v69, %v68
  %v77 = vpack.c.b16 %v71, %v70
  %v78 = vpack.c.b16 %v73, %v72
  %v79 = vpack.c.b16 %v75, %v74
  %v84 = vunpack.c.l.b16 %v56
  %v85 = vunpack.c.l.b16 %v57
  %v86 = vunpack.c.l.b16 %v58
  %v87 = vunpack.c.l.b16 %v59
  %v88 = vpack.c.b16 %v85, %v84
  %v89 = vpack.c.b16 %v87, %v86
  %vm92 = vcmask 261120
  %v94 = vsel %vm92, %v76, 0
  %v97 = vsel %vm92, %v77, 0
  %v100 = vsel %vm92, %v78, 0
  %v103 = vsel %vm92, %v79, 0
  %105 = vmatprep.subr.bf16.mxu0 0
  %106 = vmatpush1.bf16.msra.mxu0 %v88
  %107 = vmatprep.subr.bf16.mxu0 0
  %108 = vmatpush1.bf16.msra.mxu0 %v89
  %109 = vmatprep.subr.bf16.mxu0 0
  %110 = vmatpush1.bf16.msra.mxu0 0
  %111 = vmatprep.subr.bf16.mxu0 0
  %112 = vmatpush1.bf16.msra.mxu0 0
  %113 = vmatprep.subr.bf16.mxu0 0
  %114 = vmatpush1.bf16.msra.mxu0 0
  %115 = vmatprep.subr.bf16.mxu0 0
  %116 = vmatpush1.bf16.msra.mxu0 0
  %117 = vmatprep.subr.bf16.mxu0 0
  %118 = vmatpush1.bf16.msra.mxu0 0
  %119 = vmatprep.subr.bf16.mxu0 0
  %120 = vmatpush1.bf16.msra.mxu0 0
  %121 = vmatprep.subr.bf16.mxu0 0
  %122 = vmatpush1.bf16.msra.mxu0 0
  %123 = vmatprep.subr.bf16.mxu0 0
  %124 = vmatpush1.bf16.msra.mxu0 0
  %125 = vmatprep.subr.bf16.mxu0 0
  %126 = vmatpush1.bf16.msra.mxu0 0
  %127 = vmatprep.subr.bf16.mxu0 0
  %128 = vmatpush1.bf16.msra.mxu0 0
  %129 = vmatprep.subr.bf16.mxu0 0
  %130 = vmatpush1.bf16.msra.mxu0 0
  %131 = vmatprep.subr.bf16.mxu0 0
  %132 = vmatpush1.bf16.msra.mxu0 0
  %133 = vmatprep.subr.bf16.mxu0 0
  %134 = vmatpush1.bf16.msra.mxu0 0
  %135 = vmatprep.subr.bf16.mxu0 0
  %136 = vmatpush1.bf16.msra.mxu0 0
  %137 = vmatprep.mubr.bf16.mxu0 0
  %138 = vmatmul.mubr.bf16.gmra.mrb[0].mxu0 %v94
  %v139 = vpop.f32.mrb[0].mxu0
  %v140 = vadd.f32 0.0, %v139
  %v141 = vpop.f32.mrb[0].mxu0
  %v142 = vpop.f32.mrb[0].mxu0
  %v143 = vadd.f32 0.0, %v142
  %v144 = vpop.f32.mrb[0].mxu0
  %145 = vmatprep.mubr.bf16.mxu0 0
  %146 = vmatmul.mubr.bf16.gmra.mrb[0].mxu0 %v97
  %v147 = vpop.f32.mrb[0].mxu0
  %v148 = vadd.f32 0.0, %v147
  %v149 = vpop.f32.mrb[0].mxu0
  %v150 = vpop.f32.mrb[0].mxu0
  %v151 = vadd.f32 0.0, %v150
  %v152 = vpop.f32.mrb[0].mxu0
  %153 = vmatprep.mubr.bf16.mxu0 0
  %154 = vmatmul.mubr.bf16.gmra.mrb[0].mxu0 %v100
  %v155 = vpop.f32.mrb[0].mxu0
  %v156 = vadd.f32 0.0, %v155
  %v157 = vpop.f32.mrb[0].mxu0
  %v158 = vpop.f32.mrb[0].mxu0
  %v159 = vadd.f32 0.0, %v158
  %v160 = vpop.f32.mrb[0].mxu0
  %161 = vmatprep.mubr.bf16.mxu0 0
  %162 = vmatmul.mubr.bf16.gmra.mrb[0].mxu0 %v103
  %v163 = vpop.f32.mrb[0].mxu0
  %v164 = vadd.f32 0.0, %v163
  %v165 = vpop.f32.mrb[0].mxu0
  %v166 = vpop.f32.mrb[0].mxu0
  %v167 = vadd.f32 0.0, %v166
  %v168 = vpop.f32.mrb[0].mxu0
  %169 = vdwg.mxu0
  %v170 = vld [vmem:[%s5] sm:$0x1]
  %v172 = vlaneseq
  %v173 = vshrl.u32 %v172, 7
  %v174 = vsub.s32 0, %v173
  %v175 = vrot.slane %v170, %v174
  %v177 = vadd.f32 %v140, %v175
  %v178 = vadd.f32 %v143, %v175
  %v179 = vadd.f32 %v148, %v175
  %v180 = vadd.f32 %v151, %v175
  %v181 = vadd.f32 %v156, %v175
  %v182 = vadd.f32 %v159, %v175
  %v183 = vadd.f32 %v164, %v175
  %v184 = vadd.f32 %v167, %v175
  %185 = vst [vmem:[#allocation2] sm:$0xff] %v177
  %186 = vst [vmem:[#allocation2 + $0x8] sm:$0xff] %v178
  %187 = vst [vmem:[#allocation2 + $0x10] sm:$0xff] %v179
  %188 = vst [vmem:[#allocation2 + $0x18] sm:$0xff] %v180
  %189 = vst [vmem:[#allocation2 + $0x20] sm:$0xff] %v181
  %190 = vst [vmem:[#allocation2 + $0x28] sm:$0xff] %v182
  %191 = vst [vmem:[#allocation2 + $0x30] sm:$0xff] %v183
  %192 = vst [vmem:[#allocation2 + $0x38] sm:$0xff] %v184
  %v193 = vld [vmem:[%s4] sm:$0xf]
  %v194 = vld [vmem:[%s4 + $0x4] sm:$0xf]
  %v195 = vld [vmem:[%s4 + $0x8] sm:$0xf]
  %v196 = vld [vmem:[%s4 + $0xc] sm:$0xf]
  %v197 = vlaneseq
  %v198 = vand.u32 %v197, 127
  %vm199 = vcmp.lt.s32.totalorder %v198, 0
  %v200 = vsub.s32 0, %v198
  %v201 = vsel %vm199, %v200, %v198
  %v202 = vshrl.u32 %v201, 5
  %v203 = vand.u32 %v201, 31
  %v204 = vsub.s32 0, %v203
  %v205 = vsel %vm199, %v204, %v203
  %vm206 = vcmp.ne.s32.totalorder %v205, 0
  %vm207 = vcmp.lt.s32.totalorder %v205, 0
  %vm208 = vmand %vm207, %vm206
  %v209 = vadd.s32 %v205, 32
  %v210 = vsel %vm208, %v209, %v205
  %vm211 = vcmp.lt.s32.totalorder %v210, 16
  %vm212 = vcmp.lt.s32.totalorder %v198, 16
  %v213 = vld [vmem:[#allocation2] sm:$0xff]
  %s214 = scalar_lea.vmem [#allocation2], 56
  %v215 = vld [vmem:[%s214] sm:$0xff]
  %v216 = vsel %vm211, %v213, %v215
  %v221 = vunpack.c.l.b16 %v193
  %v222 = vunpack.c.l.b16 %v194
  %v223 = vunpack.c.l.b16 %v195
  %v224 = vunpack.c.l.b16 %v196
  %v225 = vpack.c.b16 %v222, %v221
  %v226 = vpack.c.b16 %v224, %v223
  %v230 = vsel %vm92, 0, 0
  %232 = vmatprep.subr.bf16.mxu0 0
  %233 = vmatpush1.bf16.msra.mxu0 %v225
  %234 = vmatprep.subr.bf16.mxu0 0
  %235 = vmatpush1.bf16.msra.mxu0 %v226
  %236 = vmatprep.subr.bf16.mxu0 0
  %237 = vmatpush1.bf16.msra.mxu0 0
  %238 = vmatprep.subr.bf16.mxu0 0
  %239 = vmatpush1.bf16.msra.mxu0 0
  %240 = vmatprep.subr.bf16.mxu0 0
  %241 = vmatpush1.bf16.msra.mxu0 0
  %242 = vmatprep.subr.bf16.mxu0 0
  %243 = vmatpush1.bf16.msra.mxu0 0
  %244 = vmatprep.subr.bf16.mxu0 0
  %245 = vmatpush1.bf16.msra.mxu0 0
  %246 = vmatprep.subr.bf16.mxu0 0
  %247 = vmatpush1.bf16.msra.mxu0 0
  %248 = vmatprep.subr.bf16.mxu0 0
  %249 = vmatpush1.bf16.msra.mxu0 0
  %250 = vmatprep.subr.bf16.mxu0 0
  %251 = vmatpush1.bf16.msra.mxu0 0
  %252 = vmatprep.subr.bf16.mxu0 0
  %253 = vmatpush1.bf16.msra.mxu0 0
  %254 = vmatprep.subr.bf16.mxu0 0
  %255 = vmatpush1.bf16.msra.mxu0 0
  %256 = vmatprep.subr.bf16.mxu0 0
  %257 = vmatpush1.bf16.msra.mxu0 0
  %258 = vmatprep.subr.bf16.mxu0 0
  %259 = vmatpush1.bf16.msra.mxu0 0
  %260 = vmatprep.subr.bf16.mxu0 0
  %261 = vmatpush1.bf16.msra.mxu0 0
  %262 = vmatprep.subr.bf16.mxu0 0
  %263 = vmatpush1.bf16.msra.mxu0 0
  %264 = vmatprep.mubr.bf16.mxu0 0
  %265 = vmatmul.mubr.bf16.gmra.mrb[0].mxu0 %v230
  %v266 = vpop.f32.mrb[0].mxu0
  %v267 = vadd.f32 0.0, %v266
  %v268 = vpop.f32.mrb[0].mxu0
  %v269 = vpop.f32.mrb[0].mxu0
  %v270 = vpop.f32.mrb[0].mxu0
  %271 = vdwg.mxu0
  %v272 = vadd.f32 %v216, %v267
  %v273 = vxor.u32 %v272, 2147483648
  %v274 = vmul.f32 %v273, 1.442695
  %v275 = vpow.pop %v274
  %v276 = vadd.f32 %v275, 1.0
  %v277 = vrcp.pop %v276
  %v278 = vmul.f32 1.0, %v277
  %v279 = vtanh.pop %v272
  %v280 = vmul.f32 %v278, 0.0
  %282 = vrot.lane.b32.xlu0 %v279, 32
  %v283 = vpop.permute.xlu0 %282
  %v285 = vmul.f32 %v278, %v283
  %287 = vrot.lane.b32.xlu0 %v285, 32
  %v288 = vpop.permute.xlu0 %287
  %v290 = vadd.f32 %v280, %v288
  %v291 = vtanh.pop %v290
  %293 = vrot.lane.b32.xlu0 %v291, 32
  %v294 = vpop.permute.xlu0 %293
  %v296 = vmul.f32 %v278, %v294
  %v297 = vld [vmem:[%s1] sm:$0xff]
  %s298 = scalar_lea.vmem %s1, 56
  %v299 = vld [vmem:[%s298] sm:$0xff]
  %301 = vset.pattern.permute.xlu0 0
  %302 = vperm.xlu0 %301, %v297
  %v303 = vpop.permute.xlu0 %302
  %306 = vset.pattern.permute.xlu0 0
  %307 = vperm.xlu0 %306, %v299
  %v308 = vpop.permute.xlu0 %307
  %v310 = vsel %vm212, %v303, %v308
  %312 = vrot.lane.b32.xlu0 %v296, 64
  %v313 = vpop.permute.xlu0 %312
  %v315 = vmul.f32 %v310, %v313
  %v316 = vsub.f32 1.0, %v310
  %v317 = vmul.f32 %v316, 0.0
  %v318 = vadd.f32 %v315, %v317
  %320 = vrot.lane.b32.xlu0 %v290, 96
  %v321 = vpop.permute.xlu0 %320
  %v323 = vmul.f32 %v310, %v321
  %v324 = vadd.f32 %v323, %v317
  %vm325 = vcmask 130048
  %326 = vst.msk [vmem:[#allocation3] sm:$0xff] %vm325, %v315
  %s327 = scalar_lea.vmem [#allocation3], 56
  %vm328 = vcmask 261248
  %329 = vst.msk [vmem:[%s327] sm:$0xff] %vm328, %v315
  %s330 = scalar_lea.vmem [#allocation2], 8
  %v331 = vld [vmem:[%s330] sm:$0xff]
  %s332 = scalar_lea.vmem [#allocation2], 48
  %v333 = vld [vmem:[%s332] sm:$0xff]
  %v334 = vsel %vm211, %v331, %v333
  %v335 = vpack.c.bf16 %v318, %v318
  %v337 = vsel %vm92, %v335, 0
  %339 = vmatprep.subr.bf16.mxu0 0
  %340 = vmatpush1.bf16.msra.mxu0 %v225
  %341 = vmatprep.subr.bf16.mxu0 0
  %342 = vmatpush1.bf16.msra.mxu0 %v226
  %343 = vmatprep.subr.bf16.mxu0 0
  %344 = vmatpush1.bf16.msra.mxu0 0
  %345 = vmatprep.subr.bf16.mxu0 0
  %346 = vmatpush1.bf16.msra.mxu0 0
  %347 = vmatprep.subr.bf16.mxu0 0
  %348 = vmatpush1.bf16.msra.mxu0 0
  %349 = vmatprep.subr.bf16.mxu0 0
  %350 = vmatpush1.bf16.msra.mxu0 0
  %351 = vmatprep.subr.bf16.mxu0 0
  %352 = vmatpush1.bf16.msra.mxu0 0
  %353 = vmatprep.subr.bf16.mxu0 0
  %354 = vmatpush1.bf16.msra.mxu0 0
  %355 = vmatprep.subr.bf16.mxu0 0
  %356 = vmatpush1.bf16.msra.mxu0 0
  %357 = vmatprep.subr.bf16.mxu0 0
  %358 = vmatpush1.bf16.msra.mxu0 0
  %359 = vmatprep.subr.bf16.mxu0 0
  %360 = vmatpush1.bf16.msra.mxu0 0
  %361 = vmatprep.subr.bf16.mxu0 0
  %362 = vmatpush1.bf16.msra.mxu0 0
  %363 = vmatprep.subr.bf16.mxu0 0
  %364 = vmatpush1.bf16.msra.mxu0 0
  %365 = vmatprep.subr.bf16.mxu0 0
  %366 = vmatpush1.bf16.msra.mxu0 0
  %367 = vmatprep.subr.bf16.mxu0 0
  %368 = vmatpush1.bf16.msra.mxu0 0
  %369 = vmatprep.subr.bf16.mxu0 0
  %370 = vmatpush1.bf16.msra.mxu0 0
  %371 = vmatprep.mubr.bf16.mxu0 0
  %372 = vmatmul.mubr.bf16.gmra.mrb[0].mxu0 %v337
  %v373 = vpop.f32.mrb[0].mxu0
  %v374 = vadd.f32 0.0, %v373
  %v375 = vpop.f32.mrb[0].mxu0
  %v376 = vpop.f32.mrb[0].mxu0
  %v377 = vpop.f32.mrb[0].mxu0
  %378 = vdwg.mxu0
  %v379 = vadd.f32 %v334, %v374
  %v380 = vxor.u32 %v379, 2147483648
  %v381 = vmul.f32 %v380, 1.442695
  %v382 = vpow.pop %v381
  %v383 = vadd.f32 %v382, 1.0
  %v384 = vrcp.pop %v383
  %v385 = vmul.f32 1.0, %v384
  %v386 = vtanh.pop %v379
  %388 = vrot.lane.b32.xlu0 %v324, 32
  %v389 = vpop.permute.xlu0 %388
  %v391 = vmul.f32 %v385, %v389
  %393 = vrot.lane.b32.xlu0 %v386, 32
  %v394 = vpop.permute.xlu0 %393
  %v396 = vmul.f32 %v385, %v394
  %398 = vrot.lane.b32.xlu0 %v396, 32
  %v399 = vpop.permute.xlu0 %398
  %v401 = vadd.f32 %v391, %v399
  %v402 = vtanh.pop %v401
  %404 = vrot.lane.b32.xlu0 %v402, 32
  %v405 = vpop.permute.xlu0 %404
  %v407 = vmul.f32 %v385, %v405
  %s408 = scalar_lea.vmem %s1, 8
  %v409 = vld [vmem:[%s408] sm:$0xff]
  %s410 = scalar_lea.vmem %s1, 48
  %v411 = vld [vmem:[%s410] sm:$0xff]
  %413 = vset.pattern.permute.xlu0 0
  %414 = vperm.xlu0 %413, %v409
  %v415 = vpop.permute.xlu0 %414
  %418 = vset.pattern.permute.xlu0 0
  %419 = vperm.xlu0 %418, %v411
  %v420 = vpop.permute.xlu0 %419
  %v422 = vsel %vm212, %v415, %v420
  %424 = vrot.lane.b32.xlu0 %v407, 64
  %v425 = vpop.permute.xlu0 %424
  %v427 = vmul.f32 %v422, %v425
  %v428 = vsub.f32 1.0, %v422
  %v429 = vmul.f32 %v428, %v318
  %v430 = vadd.f32 %v427, %v429
  %432 = vrot.lane.b32.xlu0 %v401, 96
  %v433 = vpop.permute.xlu0 %432
  %v435 = vmul.f32 %v422, %v433
  %v436 = vmul.f32 %v428, %v324
  %v437 = vadd.f32 %v435, %v436
  %s438 = scalar_lea.vmem [#allocation3], 8
  %439 = vst.msk [vmem:[%s438] sm:$0xff] %vm325, %v427
  %s440 = scalar_lea.vmem [#allocation3], 48
  %441 = vst.msk [vmem:[%s440] sm:$0xff] %vm328, %v427
  %s442 = scalar_lea.vmem [#allocation2], 16
  %v443 = vld [vmem:[%s442] sm:$0xff]
  %s444 = scalar_lea.vmem [#allocation2], 40
  %v445 = vld [vmem:[%s444] sm:$0xff]
  %v446 = vsel %vm211, %v443, %v445
  %v447 = vpack.c.bf16 %v430, %v430
  %v449 = vsel %vm92, %v447, 0
  %451 = vmatprep.subr.bf16.mxu0 0
  %452 = vmatpush1.bf16.msra.mxu0 %v225
  %453 = vmatprep.subr.bf16.mxu0 0
  %454 = vmatpush1.bf16.msra.mxu0 %v226
  %455 = vmatprep.subr.bf16.mxu0 0
  %456 = vmatpush1.bf16.msra.mxu0 0
  %457 = vmatprep.subr.bf16.mxu0 0
  %458 = vmatpush1.bf16.msra.mxu0 0
  %459 = vmatprep.subr.bf16.mxu0 0
  %460 = vmatpush1.bf16.msra.mxu0 0
  %461 = vmatprep.subr.bf16.mxu0 0
  %462 = vmatpush1.bf16.msra.mxu0 0
  %463 = vmatprep.subr.bf16.mxu0 0
  %464 = vmatpush1.bf16.msra.mxu0 0
  %465 = vmatprep.subr.bf16.mxu0 0
  %466 = vmatpush1.bf16.msra.mxu0 0
  %467 = vmatprep.subr.bf16.mxu0 0
  %468 = vmatpush1.bf16.msra.mxu0 0
  %469 = vmatprep.subr.bf16.mxu0 0
  %470 = vmatpush1.bf16.msra.mxu0 0
  %471 = vmatprep.subr.bf16.mxu0 0
  %472 = vmatpush1.bf16.msra.mxu0 0
  %473 = vmatprep.subr.bf16.mxu0 0
  %474 = vmatpush1.bf16.msra.mxu0 0
  %475 = vmatprep.subr.bf16.mxu0 0
  %476 = vmatpush1.bf16.msra.mxu0 0
  %477 = vmatprep.subr.bf16.mxu0 0
  %478 = vmatpush1.bf16.msra.mxu0 0
  %479 = vmatprep.subr.bf16.mxu0 0
  %480 = vmatpush1.bf16.msra.mxu0 0
  %481 = vmatprep.subr.bf16.mxu0 0
  %482 = vmatpush1.bf16.msra.mxu0 0
  %483 = vmatprep.mubr.bf16.mxu0 0
  %484 = vmatmul.mubr.bf16.gmra.mrb[0].mxu0 %v449
  %v485 = vpop.f32.mrb[0].mxu0
  %v486 = vadd.f32 0.0, %v485
  %v487 = vpop.f32.mrb[0].mxu0
  %v488 = vpop.f32.mrb[0].mxu0
  %v489 = vpop.f32.mrb[0].mxu0
  %490 = vdwg.mxu0
  %v491 = vadd.f32 %v446, %v486
  %v492 = vxor.u32 %v491, 2147483648
  %v493 = vmul.f32 %v492, 1.442695
  %v494 = vpow.pop %v493
  %v495 = vadd.f32 %v494, 1.0
  %v496 = vrcp.pop %v495
  %v497 = vmul.f32 1.0, %v496
  %v498 = vtanh.pop %v491
  %500 = vrot.lane.b32.xlu0 %v437, 32
  %v501 = vpop.permute.xlu0 %500
  %v503 = vmul.f32 %v497, %v501
  %505 = vrot.lane.b32.xlu0 %v498, 32
  %v506 = vpop.permute.xlu0 %505
  %v508 = vmul.f32 %v497, %v506
  %510 = vrot.lane.b32.xlu0 %v508, 32
  %v511 = vpop.permute.xlu0 %510
  %v513 = vadd.f32 %v503, %v511
  %v514 = vtanh.pop %v513
  %516 = vrot.lane.b32.xlu0 %v514, 32
  %v517 = vpop.permute.xlu0 %516
  %v519 = vmul.f32 %v497, %v517
  %s520 = scalar_lea.vmem %s1, 16
  %v521 = vld [vmem:[%s520] sm:$0xff]
  %s522 = scalar_lea.vmem %s1, 40
  %v523 = vld [vmem:[%s522] sm:$0xff]
  %525 = vset.pattern.permute.xlu0 0
  %526 = vperm.xlu0 %525, %v521
  %v527 = vpop.permute.xlu0 %526
  %530 = vset.pattern.permute.xlu0 0
  %531 = vperm.xlu0 %530, %v523
  %v532 = vpop.permute.xlu0 %531
  %v534 = vsel %vm212, %v527, %v532
  %536 = vrot.lane.b32.xlu0 %v519, 64
  %v537 = vpop.permute.xlu0 %536
  %v539 = vmul.f32 %v534, %v537
  %v540 = vsub.f32 1.0, %v534
  %v541 = vmul.f32 %v540, %v430
  %v542 = vadd.f32 %v539, %v541
  %544 = vrot.lane.b32.xlu0 %v513, 96
  %v545 = vpop.permute.xlu0 %544
  %v547 = vmul.f32 %v534, %v545
  %v548 = vmul.f32 %v540, %v437
  %v549 = vadd.f32 %v547, %v548
  %s550 = scalar_lea.vmem [#allocation3], 16
  %551 = vst.msk [vmem:[%s550] sm:$0xff] %vm325, %v539
  %s552 = scalar_lea.vmem [#allocation3], 40
  %553 = vst.msk [vmem:[%s552] sm:$0xff] %vm328, %v539
  %s554 = scalar_lea.vmem [#allocation2], 24
  %v555 = vld [vmem:[%s554] sm:$0xff]
  %s556 = scalar_lea.vmem [#allocation2], 32
  %v557 = vld [vmem:[%s556] sm:$0xff]
  %v558 = vsel %vm211, %v555, %v557
  %v559 = vpack.c.bf16 %v542, %v542
  %v561 = vsel %vm92, %v559, 0
  %563 = vmatprep.subr.bf16.mxu0 0
  %564 = vmatpush1.bf16.msra.mxu0 %v225
  %565 = vmatprep.subr.bf16.mxu0 0
  %566 = vmatpush1.bf16.msra.mxu0 %v226
  %567 = vmatprep.subr.bf16.mxu0 0
  %568 = vmatpush1.bf16.msra.mxu0 0
  %569 = vmatprep.subr.bf16.mxu0 0
  %570 = vmatpush1.bf16.msra.mxu0 0
  %571 = vmatprep.subr.bf16.mxu0 0
  %572 = vmatpush1.bf16.msra.mxu0 0
  %573 = vmatprep.subr.bf16.mxu0 0
  %574 = vmatpush1.bf16.msra.mxu0 0
  %575 = vmatprep.subr.bf16.mxu0 0
  %576 = vmatpush1.bf16.msra.mxu0 0
  %577 = vmatprep.subr.bf16.mxu0 0
  %578 = vmatpush1.bf16.msra.mxu0 0
  %579 = vmatprep.subr.bf16.mxu0 0
  %580 = vmatpush1.bf16.msra.mxu0 0
  %581 = vmatprep.subr.bf16.mxu0 0
  %582 = vmatpush1.bf16.msra.mxu0 0
  %583 = vmatprep.subr.bf16.mxu0 0
  %584 = vmatpush1.bf16.msra.mxu0 0
  %585 = vmatprep.subr.bf16.mxu0 0
  %586 = vmatpush1.bf16.msra.mxu0 0
  %587 = vmatprep.subr.bf16.mxu0 0
  %588 = vmatpush1.bf16.msra.mxu0 0
  %589 = vmatprep.subr.bf16.mxu0 0
  %590 = vmatpush1.bf16.msra.mxu0 0
  %591 = vmatprep.subr.bf16.mxu0 0
  %592 = vmatpush1.bf16.msra.mxu0 0
  %593 = vmatprep.subr.bf16.mxu0 0
  %594 = vmatpush1.bf16.msra.mxu0 0
  %595 = vmatprep.mubr.bf16.mxu0 0
  %596 = vmatmul.mubr.bf16.gmra.mrb[0].mxu0 %v561
  %v597 = vpop.f32.mrb[0].mxu0
  %v598 = vadd.f32 0.0, %v597
  %v599 = vpop.f32.mrb[0].mxu0
  %v600 = vpop.f32.mrb[0].mxu0
  %v601 = vpop.f32.mrb[0].mxu0
  %602 = vdwg.mxu0
  %v603 = vadd.f32 %v558, %v598
  %v604 = vxor.u32 %v603, 2147483648
  %v605 = vmul.f32 %v604, 1.442695
  %v606 = vpow.pop %v605
  %v607 = vadd.f32 %v606, 1.0
  %v608 = vrcp.pop %v607
  %v609 = vmul.f32 1.0, %v608
  %v610 = vtanh.pop %v603
  %612 = vrot.lane.b32.xlu0 %v549, 32
  %v613 = vpop.permute.xlu0 %612
  %v615 = vmul.f32 %v609, %v613
  %617 = vrot.lane.b32.xlu0 %v610, 32
  %v618 = vpop.permute.xlu0 %617
  %v620 = vmul.f32 %v609, %v618
  %622 = vrot.lane.b32.xlu0 %v620, 32
  %v623 = vpop.permute.xlu0 %622
  %v625 = vadd.f32 %v615, %v623
  %v626 = vtanh.pop %v625
  %628 = vrot.lane.b32.xlu0 %v626, 32
  %v629 = vpop.permute.xlu0 %628
  %v631 = vmul.f32 %v609, %v629
  %s632 = scalar_lea.vmem %s1, 24
  %v633 = vld [vmem:[%s632] sm:$0xff]
  %s634 = scalar_lea.vmem %s1, 32
  %v635 = vld [vmem:[%s634] sm:$0xff]
  %637 = vset.pattern.permute.xlu0 0
  %638 = vperm.xlu0 %637, %v633
  %v639 = vpop.permute.xlu0 %638
  %642 = vset.pattern.permute.xlu0 0
  %643 = vperm.xlu0 %642, %v635
  %v644 = vpop.permute.xlu0 %643
  %v646 = vsel %vm212, %v639, %v644
  %648 = vrot.lane.b32.xlu0 %v631, 64
  %v649 = vpop.permute.xlu0 %648
  %v651 = vmul.f32 %v646, %v649
  %v652 = vsub.f32 1.0, %v646
  %v653 = vmul.f32 %v652, %v542
  %v654 = vadd.f32 %v651, %v653
  %656 = vrot.lane.b32.xlu0 %v625, 96
  %v657 = vpop.permute.xlu0 %656
  %v659 = vmul.f32 %v646, %v657
  %v660 = vmul.f32 %v652, %v549
  %v661 = vadd.f32 %v659, %v660
  %s662 = scalar_lea.vmem [#allocation3], 24
  %663 = vst.msk [vmem:[%s662] sm:$0xff] %vm325, %v651
  %s664 = scalar_lea.vmem [#allocation3], 32
  %665 = vst.msk [vmem:[%s664] sm:$0xff] %vm328, %v651
  %v666 = vld [vmem:[%s556] sm:$0xff]
  %v667 = vld [vmem:[%s554] sm:$0xff]
  %v668 = vsel %vm211, %v666, %v667
  %v669 = vpack.c.bf16 %v654, %v654
  %v671 = vsel %vm92, %v669, 0
  %673 = vmatprep.subr.bf16.mxu0 0
  %674 = vmatpush1.bf16.msra.mxu0 %v225
  %675 = vmatprep.subr.bf16.mxu0 0
  %676 = vmatpush1.bf16.msra.mxu0 %v226
  %677 = vmatprep.subr.bf16.mxu0 0
  %678 = vmatpush1.bf16.msra.mxu0 0
  %679 = vmatprep.subr.bf16.mxu0 0
  %680 = vmatpush1.bf16.msra.mxu0 0
  %681 = vmatprep.subr.bf16.mxu0 0
  %682 = vmatpush1.bf16.msra.mxu0 0
  %683 = vmatprep.subr.bf16.mxu0 0
  %684 = vmatpush1.bf16.msra.mxu0 0
  %685 = vmatprep.subr.bf16.mxu0 0
  %686 = vmatpush1.bf16.msra.mxu0 0
  %687 = vmatprep.subr.bf16.mxu0 0
  %688 = vmatpush1.bf16.msra.mxu0 0
  %689 = vmatprep.subr.bf16.mxu0 0
  %690 = vmatpush1.bf16.msra.mxu0 0
  %691 = vmatprep.subr.bf16.mxu0 0
  %692 = vmatpush1.bf16.msra.mxu0 0
  %693 = vmatprep.subr.bf16.mxu0 0
  %694 = vmatpush1.bf16.msra.mxu0 0
  %695 = vmatprep.subr.bf16.mxu0 0
  %696 = vmatpush1.bf16.msra.mxu0 0
  %697 = vmatprep.subr.bf16.mxu0 0
  %698 = vmatpush1.bf16.msra.mxu0 0
  %699 = vmatprep.subr.bf16.mxu0 0
  %700 = vmatpush1.bf16.msra.mxu0 0
  %701 = vmatprep.subr.bf16.mxu0 0
  %702 = vmatpush1.bf16.msra.mxu0 0
  %703 = vmatprep.subr.bf16.mxu0 0
  %704 = vmatpush1.bf16.msra.mxu0 0
  %705 = vmatprep.mubr.bf16.mxu0 0
  %706 = vmatmul.mubr.bf16.gmra.mrb[0].mxu0 %v671
  %v707 = vpop.f32.mrb[0].mxu0
  %v708 = vadd.f32 0.0, %v707
  %v709 = vpop.f32.mrb[0].mxu0
  %v710 = vpop.f32.mrb[0].mxu0
  %v711 = vpop.f32.mrb[0].mxu0
  %712 = vdwg.mxu0
  %v713 = vadd.f32 %v668, %v708
  %v714 = vxor.u32 %v713, 2147483648
  %v715 = vmul.f32 %v714, 1.442695
  %v716 = vpow.pop %v715
  %v717 = vadd.f32 %v716, 1.0
  %v718 = vrcp.pop %v717
  %v719 = vmul.f32 1.0, %v718
  %v720 = vtanh.pop %v713
  %722 = vrot.lane.b32.xlu0 %v661, 32
  %v723 = vpop.permute.xlu0 %722
  %v725 = vmul.f32 %v719, %v723
  %727 = vrot.lane.b32.xlu0 %v720, 32
  %v728 = vpop.permute.xlu0 %727
  %v730 = vmul.f32 %v719, %v728
  %732 = vrot.lane.b32.xlu0 %v730, 32
  %v733 = vpop.permute.xlu0 %732
  %v735 = vadd.f32 %v725, %v733
  %v736 = vtanh.pop %v735
  %738 = vrot.lane.b32.xlu0 %v736, 32
  %v739 = vpop.permute.xlu0 %738
  %v741 = vmul.f32 %v719, %v739
  %v742 = vld [vmem:[%s634] sm:$0xff]
  %v743 = vld [vmem:[%s632] sm:$0xff]
  %745 = vset.pattern.permute.xlu0 0
  %746 = vperm.xlu0 %745, %v742
  %v747 = vpop.permute.xlu0 %746
  %750 = vset.pattern.permute.xlu0 0
  %751 = vperm.xlu0 %750, %v743
  %v752 = vpop.permute.xlu0 %751
  %v754 = vsel %vm212, %v747, %v752
  %756 = vrot.lane.b32.xlu0 %v741, 64
  %v757 = vpop.permute.xlu0 %756
  %v759 = vmul.f32 %v754, %v757
  %v760 = vsub.f32 1.0, %v754
  %v761 = vmul.f32 %v760, %v654
  %v762 = vadd.f32 %v759, %v761
  %764 = vrot.lane.b32.xlu0 %v735, 96
  %v765 = vpop.permute.xlu0 %764
  %v767 = vmul.f32 %v754, %v765
  %v768 = vmul.f32 %v760, %v661
  %v769 = vadd.f32 %v767, %v768
  %770 = vst.msk [vmem:[%s664] sm:$0xff] %vm325, %v759
  %771 = vst.msk [vmem:[%s662] sm:$0xff] %vm328, %v759
  %v772 = vld [vmem:[%s444] sm:$0xff]
  %v773 = vld [vmem:[%s442] sm:$0xff]
  %v774 = vsel %vm211, %v772, %v773
  %v775 = vpack.c.bf16 %v762, %v762
  %v777 = vsel %vm92, %v775, 0
  %779 = vmatprep.subr.bf16.mxu0 0
  %780 = vmatpush1.bf16.msra.mxu0 %v225
  %781 = vmatprep.subr.bf16.mxu0 0
  %782 = vmatpush1.bf16.msra.mxu0 %v226
  %783 = vmatprep.subr.bf16.mxu0 0
  %784 = vmatpush1.bf16.msra.mxu0 0
  %785 = vmatprep.subr.bf16.mxu0 0
  %786 = vmatpush1.bf16.msra.mxu0 0
  %787 = vmatprep.subr.bf16.mxu0 0
  %788 = vmatpush1.bf16.msra.mxu0 0
  %789 = vmatprep.subr.bf16.mxu0 0
  %790 = vmatpush1.bf16.msra.mxu0 0
  %791 = vmatprep.subr.bf16.mxu0 0
  %792 = vmatpush1.bf16.msra.mxu0 0
  %793 = vmatprep.subr.bf16.mxu0 0
  %794 = vmatpush1.bf16.msra.mxu0 0
  %795 = vmatprep.subr.bf16.mxu0 0
  %796 = vmatpush1.bf16.msra.mxu0 0
  %797 = vmatprep.subr.bf16.mxu0 0
  %798 = vmatpush1.bf16.msra.mxu0 0
  %799 = vmatprep.subr.bf16.mxu0 0
  %800 = vmatpush1.bf16.msra.mxu0 0
  %801 = vmatprep.subr.bf16.mxu0 0
  %802 = vmatpush1.bf16.msra.mxu0 0
  %803 = vmatprep.subr.bf16.mxu0 0
  %804 = vmatpush1.bf16.msra.mxu0 0
  %805 = vmatprep.subr.bf16.mxu0 0
  %806 = vmatpush1.bf16.msra.mxu0 0
  %807 = vmatprep.subr.bf16.mxu0 0
  %808 = vmatpush1.bf16.msra.mxu0 0
  %809 = vmatprep.subr.bf16.mxu0 0
  %810 = vmatpush1.bf16.msra.mxu0 0
  %811 = vmatprep.mubr.bf16.mxu0 0
  %812 = vmatmul.mubr.bf16.gmra.mrb[0].mxu0 %v777
  %v813 = vpop.f32.mrb[0].mxu0
  %v814 = vadd.f32 0.0, %v813
  %v815 = vpop.f32.mrb[0].mxu0
  %v816 = vpop.f32.mrb[0].mxu0
  %v817 = vpop.f32.mrb[0].mxu0
  %818 = vdwg.mxu0
  %v819 = vadd.f32 %v774, %v814
  %v820 = vxor.u32 %v819, 2147483648
  %v821 = vmul.f32 %v820, 1.442695
  %v822 = vpow.pop %v821
  %v823 = vadd.f32 %v822, 1.0
  %v824 = vrcp.pop %v823
  %v825 = vmul.f32 1.0, %v824
  %v826 = vtanh.pop %v819
  %828 = vrot.lane.b32.xlu0 %v769, 32
  %v829 = vpop.permute.xlu0 %828
  %v831 = vmul.f32 %v825, %v829
  %833 = vrot.lane.b32.xlu0 %v826, 32
  %v834 = vpop.permute.xlu0 %833
  %v836 = vmul.f32 %v825, %v834
  %838 = vrot.lane.b32.xlu0 %v836, 32
  %v839 = vpop.permute.xlu0 %838
  %v841 = vadd.f32 %v831, %v839
  %v842 = vtanh.pop %v841
  %844 = vrot.lane.b32.xlu0 %v842, 32
  %v845 = vpop.permute.xlu0 %844
  %v847 = vmul.f32 %v825, %v845
  %v848 = vld [vmem:[%s522] sm:$0xff]
  %v849 = vld [vmem:[%s520] sm:$0xff]
  %851 = vset.pattern.permute.xlu0 0
  %852 = vperm.xlu0 %851, %v848
  %v853 = vpop.permute.xlu0 %852
  %856 = vset.pattern.permute.xlu0 0
  %857 = vperm.xlu0 %856, %v849
  %v858 = vpop.permute.xlu0 %857
  %v860 = vsel %vm212, %v853, %v858
  %862 = vrot.lane.b32.xlu0 %v847, 64
  %v863 = vpop.permute.xlu0 %862
  %v865 = vmul.f32 %v860, %v863
  %v866 = vsub.f32 1.0, %v860
  %v867 = vmul.f32 %v866, %v762
  %v868 = vadd.f32 %v865, %v867
  %870 = vrot.lane.b32.xlu0 %v841, 96
  %v871 = vpop.permute.xlu0 %870
  %v873 = vmul.f32 %v860, %v871
  %v874 = vmul.f32 %v866, %v769
  %v875 = vadd.f32 %v873, %v874
  %876 = vst.msk [vmem:[%s552] sm:$0xff] %vm325, %v865
  %877 = vst.msk [vmem:[%s550] sm:$0xff] %vm328, %v865
  %v878 = vld [vmem:[%s332] sm:$0xff]
  %v879 = vld [vmem:[%s330] sm:$0xff]
  %v880 = vsel %vm211, %v878, %v879
  %v881 = vpack.c.bf16 %v868, %v868
  %v883 = vsel %vm92, %v881, 0
  %885 = vmatprep.subr.bf16.mxu0 0
  %886 = vmatpush1.bf16.msra.mxu0 %v225
  %887 = vmatprep.subr.bf16.mxu0 0
  %888 = vmatpush1.bf16.msra.mxu0 %v226
  %889 = vmatprep.subr.bf16.mxu0 0
  %890 = vmatpush1.bf16.msra.mxu0 0
  %891 = vmatprep.subr.bf16.mxu0 0
  %892 = vmatpush1.bf16.msra.mxu0 0
  %893 = vmatprep.subr.bf16.mxu0 0
  %894 = vmatpush1.bf16.msra.mxu0 0
  %895 = vmatprep.subr.bf16.mxu0 0
  %896 = vmatpush1.bf16.msra.mxu0 0
  %897 = vmatprep.subr.bf16.mxu0 0
  %898 = vmatpush1.bf16.msra.mxu0 0
  %899 = vmatprep.subr.bf16.mxu0 0
  %900 = vmatpush1.bf16.msra.mxu0 0
  %901 = vmatprep.subr.bf16.mxu0 0
  %902 = vmatpush1.bf16.msra.mxu0 0
  %903 = vmatprep.subr.bf16.mxu0 0
  %904 = vmatpush1.bf16.msra.mxu0 0
  %905 = vmatprep.subr.bf16.mxu0 0
  %906 = vmatpush1.bf16.msra.mxu0 0
  %907 = vmatprep.subr.bf16.mxu0 0
  %908 = vmatpush1.bf16.msra.mxu0 0
  %909 = vmatprep.subr.bf16.mxu0 0
  %910 = vmatpush1.bf16.msra.mxu0 0
  %911 = vmatprep.subr.bf16.mxu0 0
  %912 = vmatpush1.bf16.msra.mxu0 0
  %913 = vmatprep.subr.bf16.mxu0 0
  %914 = vmatpush1.bf16.msra.mxu0 0
  %915 = vmatprep.subr.bf16.mxu0 0
  %916 = vmatpush1.bf16.msra.mxu0 0
  %917 = vmatprep.mubr.bf16.mxu0 0
  %918 = vmatmul.mubr.bf16.gmra.mrb[0].mxu0 %v883
  %v919 = vpop.f32.mrb[0].mxu0
  %v920 = vadd.f32 0.0, %v919
  %v921 = vpop.f32.mrb[0].mxu0
  %v922 = vpop.f32.mrb[0].mxu0
  %v923 = vpop.f32.mrb[0].mxu0
  %924 = vdwg.mxu0
  %v925 = vadd.f32 %v880, %v920
  %v926 = vxor.u32 %v925, 2147483648
  %v927 = vmul.f32 %v926, 1.442695
  %v928 = vpow.pop %v927
  %v929 = vadd.f32 %v928, 1.0
  %v930 = vrcp.pop %v929
  %v931 = vmul.f32 1.0, %v930
  %v932 = vtanh.pop %v925
  %934 = vrot.lane.b32.xlu0 %v875, 32
  %v935 = vpop.permute.xlu0 %934
  %v937 = vmul.f32 %v931, %v935
  %939 = vrot.lane.b32.xlu0 %v932, 32
  %v940 = vpop.permute.xlu0 %939
  %v942 = vmul.f32 %v931, %v940
  %944 = vrot.lane.b32.xlu0 %v942, 32
  %v945 = vpop.permute.xlu0 %944
  %v947 = vadd.f32 %v937, %v945
  %v948 = vtanh.pop %v947
  %950 = vrot.lane.b32.xlu0 %v948, 32
  %v951 = vpop.permute.xlu0 %950
  %v953 = vmul.f32 %v931, %v951
  %v954 = vld [vmem:[%s410] sm:$0xff]
  %v955 = vld [vmem:[%s408] sm:$0xff]
  %957 = vset.pattern.permute.xlu0 0
  %958 = vperm.xlu0 %957, %v954
  %v959 = vpop.permute.xlu0 %958
  %962 = vset.pattern.permute.xlu0 0
  %963 = vperm.xlu0 %962, %v955
  %v964 = vpop.permute.xlu0 %963
  %v966 = vsel %vm212, %v959, %v964
  %968 = vrot.lane.b32.xlu0 %v953, 64
  %v969 = vpop.permute.xlu0 %968
  %v971 = vmul.f32 %v966, %v969
  %v972 = vsub.f32 1.0, %v966
  %v973 = vmul.f32 %v972, %v868
  %v974 = vadd.f32 %v971, %v973
  %976 = vrot.lane.b32.xlu0 %v947, 96
  %v977 = vpop.permute.xlu0 %976
  %v979 = vmul.f32 %v966, %v977
  %v980 = vmul.f32 %v972, %v875
  %v981 = vadd.f32 %v979, %v980
  %982 = vst.msk [vmem:[%s440] sm:$0xff] %vm325, %v971
  %983 = vst.msk [vmem:[%s438] sm:$0xff] %vm328, %v971
  %v984 = vld [vmem:[%s214] sm:$0xff]
  %v985 = vld [vmem:[#allocation2] sm:$0xff]
  %v986 = vsel %vm211, %v984, %v985
  %v987 = vpack.c.bf16 %v974, %v974
  %v989 = vsel %vm92, %v987, 0
  %991 = vmatprep.subr.bf16.mxu0 0
  %992 = vmatpush1.bf16.msra.mxu0 %v225
  %993 = vmatprep.subr.bf16.mxu0 0
  %994 = vmatpush1.bf16.msra.mxu0 %v226
  %995 = vmatprep.subr.bf16.mxu0 0
  %996 = vmatpush1.bf16.msra.mxu0 0
  %997 = vmatprep.subr.bf16.mxu0 0
  %998 = vmatpush1.bf16.msra.mxu0 0
  %999 = vmatprep.subr.bf16.mxu0 0
  %1000 = vmatpush1.bf16.msra.mxu0 0
  %1001 = vmatprep.subr.bf16.mxu0 0
  %1002 = vmatpush1.bf16.msra.mxu0 0
  %1003 = vmatprep.subr.bf16.mxu0 0
  %1004 = vmatpush1.bf16.msra.mxu0 0
  %1005 = vmatprep.subr.bf16.mxu0 0
  %1006 = vmatpush1.bf16.msra.mxu0 0
  %1007 = vmatprep.subr.bf16.mxu0 0
  %1008 = vmatpush1.bf16.msra.mxu0 0
  %1009 = vmatprep.subr.bf16.mxu0 0
  %1010 = vmatpush1.bf16.msra.mxu0 0
  %1011 = vmatprep.subr.bf16.mxu0 0
  %1012 = vmatpush1.bf16.msra.mxu0 0
  %1013 = vmatprep.subr.bf16.mxu0 0
  %1014 = vmatpush1.bf16.msra.mxu0 0
  %1015 = vmatprep.subr.bf16.mxu0 0
  %1016 = vmatpush1.bf16.msra.mxu0 0
  %1017 = vmatprep.subr.bf16.mxu0 0
  %1018 = vmatpush1.bf16.msra.mxu0 0
  %1019 = vmatprep.subr.bf16.mxu0 0
  %1020 = vmatpush1.bf16.msra.mxu0 0
  %1021 = vmatprep.subr.bf16.mxu0 0
  %1022 = vmatpush1.bf16.msra.mxu0 0
  %1023 = vmatprep.mubr.bf16.mxu0 0
  %1024 = vmatmul.mubr.bf16.gmra.mrb[0].mxu0 %v989
  %v1025 = vpop.f32.mrb[0].mxu0
  %v1026 = vadd.f32 0.0, %v1025
  %v1027 = vpop.f32.mrb[0].mxu0
  %v1028 = vpop.f32.mrb[0].mxu0
  %v1029 = vpop.f32.mrb[0].mxu0
  %1030 = vdwg.mxu0
  %v1031 = vadd.f32 %v986, %v1026
  %v1032 = vxor.u32 %v1031, 2147483648
  %v1033 = vmul.f32 %v1032, 1.442695
  %v1034 = vpow.pop %v1033
  %v1035 = vadd.f32 %v1034, 1.0
  %v1036 = vrcp.pop %v1035
  %v1037 = vmul.f32 1.0, %v1036
  %v1038 = vtanh.pop %v1031
  %1040 = vrot.lane.b32.xlu0 %v981, 32
  %v1041 = vpop.permute.xlu0 %1040
  %v1043 = vmul.f32 %v1037, %v1041
  %1045 = vrot.lane.b32.xlu0 %v1038, 32
  %v1046 = vpop.permute.xlu0 %1045
  %v1048 = vmul.f32 %v1037, %v1046
  %1050 = vrot.lane.b32.xlu0 %v1048, 32
  %v1051 = vpop.permute.xlu0 %1050
  %v1053 = vadd.f32 %v1043, %v1051
  %v1054 = vtanh.pop %v1053
  %1056 = vrot.lane.b32.xlu0 %v1054, 32
  %v1057 = vpop.permute.xlu0 %1056
  %v1059 = vmul.f32 %v1037, %v1057
  %v1060 = vld [vmem:[%s298] sm:$0xff]
  %v1061 = vld [vmem:[%s1] sm:$0xff]
  %1063 = vset.pattern.permute.xlu0 0
  %1064 = vperm.xlu0 %1063, %v1060
  %v1065 = vpop.permute.xlu0 %1064
  %1068 = vset.pattern.permute.xlu0 0
  %1069 = vperm.xlu0 %1068, %v1061
  %v1070 = vpop.permute.xlu0 %1069
  %v1072 = vsel %vm212, %v1065, %v1070
  %1074 = vrot.lane.b32.xlu0 %v1059, 64
  %v1075 = vpop.permute.xlu0 %1074
  %v1077 = vmul.f32 %v1072, %v1075
  %1078 = vst.msk [vmem:[%s327] sm:$0xff] %vm325, %v1077
  %1079 = vst.msk [vmem:[#allocation3] sm:$0xff] %vm328, %v1077
  %v1080 = vld [vmem:[#allocation3] sm:$0xff]
  %v1081 = vld [vmem:[#allocation3 + $0x8] sm:$0xff]
  %v1082 = vld [vmem:[#allocation3 + $0x10] sm:$0xff]
  %v1083 = vld [vmem:[#allocation3 + $0x18] sm:$0xff]
  %v1084 = vld [vmem:[#allocation3 + $0x20] sm:$0xff]
  %v1085 = vld [vmem:[#allocation3 + $0x28] sm:$0xff]
  %v1086 = vld [vmem:[#allocation3 + $0x30] sm:$0xff]
  %v1087 = vld [vmem:[#allocation3 + $0x38] sm:$0xff]
  %v1088 = vpack.c.bf16 %v1080, %v1080
  %v1089 = vpack.c.bf16 %v1081, %v1081
  %v1090 = vpack.c.bf16 %v1082, %v1082
  %v1091 = vpack.c.bf16 %v1083, %v1083
  %v1092 = vpack.c.bf16 %v1084, %v1084
  %v1093 = vpack.c.bf16 %v1085, %v1085
  %v1094 = vpack.c.bf16 %v1086, %v1086
  %v1095 = vpack.c.bf16 %v1087, %v1087
  %v1096 = vld [vmem:[%s2] sm:$0xf]
  %v1097 = vld [vmem:[%s6] sm:$0xf]
  %v1098 = vld [vmem:[%s6 + $0x4] sm:$0xf]
  %v1099 = vld [vmem:[%s6 + $0x8] sm:$0xf]
  %v1100 = vld [vmem:[%s6 + $0xc] sm:$0xf]
  %v1109 = vunpack.c.l.b16 %v1088
  %v1110 = vunpack.c.l.b16 %v1089
  %v1111 = vunpack.c.l.b16 %v1090
  %v1112 = vunpack.c.l.b16 %v1091
  %v1113 = vunpack.c.l.b16 %v1092
  %v1114 = vunpack.c.l.b16 %v1093
  %v1115 = vunpack.c.l.b16 %v1094
  %v1116 = vunpack.c.l.b16 %v1095
  %v1117 = vpack.c.b16 %v1110, %v1109
  %v1118 = vpack.c.b16 %v1112, %v1111
  %v1119 = vpack.c.b16 %v1114, %v1113
  %v1120 = vpack.c.b16 %v1116, %v1115
  %v1125 = vunpack.c.l.b16 %v1097
  %v1126 = vunpack.c.l.b16 %v1098
  %v1127 = vunpack.c.l.b16 %v1099
  %v1128 = vunpack.c.l.b16 %v1100
  %v1129 = vpack.c.b16 %v1126, %v1125
  %v1130 = vpack.c.b16 %v1128, %v1127
  %v1134 = vsel %vm92, %v1117, 0
  %v1137 = vsel %vm92, %v1118, 0
  %v1140 = vsel %vm92, %v1119, 0
  %v1143 = vsel %vm92, %v1120, 0
  %1145 = vmatprep.subr.bf16.mxu0 0
  %1146 = vmatpush1.bf16.msra.mxu0 %v1129
  %1147 = vmatprep.subr.bf16.mxu0 0
  %1148 = vmatpush1.bf16.msra.mxu0 %v1130
  %1149 = vmatprep.subr.bf16.mxu0 0
  %1150 = vmatpush1.bf16.msra.mxu0 0
  %1151 = vmatprep.subr.bf16.mxu0 0
  %1152 = vmatpush1.bf16.msra.mxu0 0
  %1153 = vmatprep.subr.bf16.mxu0 0
  %1154 = vmatpush1.bf16.msra.mxu0 0
  %1155 = vmatprep.subr.bf16.mxu0 0
  %1156 = vmatpush1.bf16.msra.mxu0 0
  %1157 = vmatprep.subr.bf16.mxu0 0
  %1158 = vmatpush1.bf16.msra.mxu0 0
  %1159 = vmatprep.subr.bf16.mxu0 0
  %1160 = vmatpush1.bf16.msra.mxu0 0
  %1161 = vmatprep.subr.bf16.mxu0 0
  %1162 = vmatpush1.bf16.msra.mxu0 0
  %1163 = vmatprep.subr.bf16.mxu0 0
  %1164 = vmatpush1.bf16.msra.mxu0 0
  %1165 = vmatprep.subr.bf16.mxu0 0
  %1166 = vmatpush1.bf16.msra.mxu0 0
  %1167 = vmatprep.subr.bf16.mxu0 0
  %1168 = vmatpush1.bf16.msra.mxu0 0
  %1169 = vmatprep.subr.bf16.mxu0 0
  %1170 = vmatpush1.bf16.msra.mxu0 0
  %1171 = vmatprep.subr.bf16.mxu0 0
  %1172 = vmatpush1.bf16.msra.mxu0 0
  %1173 = vmatprep.subr.bf16.mxu0 0
  %1174 = vmatpush1.bf16.msra.mxu0 0
  %1175 = vmatprep.subr.bf16.mxu0 0
  %1176 = vmatpush1.bf16.msra.mxu0 0
  %1177 = vmatprep.mubr.bf16.mxu0 0
  %1178 = vmatmul.mubr.bf16.gmra.mrb[0].mxu0 %v1134
  %v1179 = vpop.f32.mrb[0].mxu0
  %v1180 = vadd.f32 0.0, %v1179
  %v1181 = vpop.f32.mrb[0].mxu0
  %v1182 = vpop.f32.mrb[0].mxu0
  %v1183 = vadd.f32 0.0, %v1182
  %v1184 = vpop.f32.mrb[0].mxu0
  %1185 = vmatprep.mubr.bf16.mxu0 0
  %1186 = vmatmul.mubr.bf16.gmra.mrb[0].mxu0 %v1137
  %v1187 = vpop.f32.mrb[0].mxu0
  %v1188 = vadd.f32 0.0, %v1187
  %v1189 = vpop.f32.mrb[0].mxu0
  %v1190 = vpop.f32.mrb[0].mxu0
  %v1191 = vadd.f32 0.0, %v1190
  %v1192 = vpop.f32.mrb[0].mxu0
  %1193 = vmatprep.mubr.bf16.mxu0 0
  %1194 = vmatmul.mubr.bf16.gmra.mrb[0].mxu0 %v1140
  %v1195 = vpop.f32.mrb[0].mxu0
  %v1196 = vadd.f32 0.0, %v1195
  %v1197 = vpop.f32.mrb[0].mxu0
  %v1198 = vpop.f32.mrb[0].mxu0
  %v1199 = vadd.f32 0.0, %v1198
  %v1200 = vpop.f32.mrb[0].mxu0
  %1201 = vmatprep.mubr.bf16.mxu0 0
  %1202 = vmatmul.mubr.bf16.gmra.mrb[0].mxu0 %v1143
  %v1203 = vpop.f32.mrb[0].mxu0
  %v1204 = vadd.f32 0.0, %v1203
  %v1205 = vpop.f32.mrb[0].mxu0
  %v1206 = vpop.f32.mrb[0].mxu0
  %v1207 = vadd.f32 0.0, %v1206
  %v1208 = vpop.f32.mrb[0].mxu0
  %1209 = vdwg.mxu0
  %v1210 = vld [vmem:[%s7] sm:$0xf]
  %v1211 = vld [vmem:[%s7 + $0x4] sm:$0xf]
  %v1214 = vunpack.c.l.b16 %v1210
  %v1215 = vunpack.c.l.b16 %v1211
  %v1216 = vpack.c.b16 %v1215, %v1214
  %v1219 = vsel %vm325, %v1096, 0
  %1221 = vmatprep.subr.bf16.mxu0 0
  %1222 = vmatpush1.bf16.msra.mxu0 %v1216
  %1223 = vmatprep.subr.bf16.mxu0 0
  %1224 = vmatpush1.bf16.msra.mxu0 0
  %1225 = vmatprep.subr.bf16.mxu0 0
  %1226 = vmatpush1.bf16.msra.mxu0 0
  %1227 = vmatprep.subr.bf16.mxu0 0
  %1228 = vmatpush1.bf16.msra.mxu0 0
  %1229 = vmatprep.subr.bf16.mxu0 0
  %1230 = vmatpush1.bf16.msra.mxu0 0
  %1231 = vmatprep.subr.bf16.mxu0 0
  %1232 = vmatpush1.bf16.msra.mxu0 0
  %1233 = vmatprep.subr.bf16.mxu0 0
  %1234 = vmatpush1.bf16.msra.mxu0 0
  %1235 = vmatprep.subr.bf16.mxu0 0
  %1236 = vmatpush1.bf16.msra.mxu0 0
  %1237 = vmatprep.subr.bf16.mxu0 0
  %1238 = vmatpush1.bf16.msra.mxu0 0
  %1239 = vmatprep.subr.bf16.mxu0 0
  %1240 = vmatpush1.bf16.msra.mxu0 0
  %1241 = vmatprep.subr.bf16.mxu0 0
  %1242 = vmatpush1.bf16.msra.mxu0 0
  %1243 = vmatprep.subr.bf16.mxu0 0
  %1244 = vmatpush1.bf16.msra.mxu0 0
  %1245 = vmatprep.subr.bf16.mxu0 0
  %1246 = vmatpush1.bf16.msra.mxu0 0
  %1247 = vmatprep.subr.bf16.mxu0 0
  %1248 = vmatpush1.bf16.msra.mxu0 0
  %1249 = vmatprep.subr.bf16.mxu0 0
  %1250 = vmatpush1.bf16.msra.mxu0 0
  %1251 = vmatprep.subr.bf16.mxu0 0
  %1252 = vmatpush1.bf16.msra.mxu0 0
  %1253 = vmatprep.mubr.bf16.mxu0 0
  %1254 = vmatmul.mubr.bf16.gmra.mrb[0].mxu0 %v1219
  %v1255 = vpop.f32.mrb[0].mxu0
  %v1256 = vadd.f32 0.0, %v1255
  %v1257 = vpop.f32.mrb[0].mxu0
  %v1258 = vpop.f32.mrb[0].mxu0
  %v1259 = vpop.f32.mrb[0].mxu0
  %1260 = vdwg.mxu0
  %v1261 = vadd.f32 %v1180, %v1256
  %v1262 = vadd.f32 %v1183, %v1256
  %v1263 = vadd.f32 %v1188, %v1256
  %v1264 = vadd.f32 %v1191, %v1256
  %v1265 = vadd.f32 %v1196, %v1256
  %v1266 = vadd.f32 %v1199, %v1256
  %v1267 = vadd.f32 %v1204, %v1256
  %v1268 = vadd.f32 %v1207, %v1256
  %v1269 = vtanh.pop %v1261
  %v1270 = vtanh.pop %v1262
  %v1271 = vtanh.pop %v1263
  %v1272 = vtanh.pop %v1264
  %v1273 = vtanh.pop %v1265
  %v1274 = vtanh.pop %v1266
  %v1275 = vtanh.pop %v1267
  %v1276 = vtanh.pop %v1268
  %v1277 = vld [vmem:[%s8] sm:$0x1]
  %v1279 = vlaneseq
  %v1280 = vshrl.u32 %v1279, 7
  %v1281 = vsub.s32 0, %v1280
  %v1282 = vrot.slane %v1277, %v1281
  %v1284 = vmul.f32 %v1269, %v1282
  %v1285 = vmul.f32 %v1270, %v1282
  %v1286 = vmul.f32 %v1271, %v1282
  %v1287 = vmul.f32 %v1272, %v1282
  %v1288 = vmul.f32 %v1273, %v1282
  %v1289 = vmul.f32 %v1274, %v1282
  %v1290 = vmul.f32 %v1275, %v1282
  %v1291 = vmul.f32 %v1276, %v1282
  %v1292 = vsel %vm92, %v1284, 0.0
  %1293 = vadd.xlane.f32.xlu0 %v1292
  %v1294 = vpop.xlane.xlu0 %1293
  %v1295 = vsel %vm92, %v1285, 0.0
  %1296 = vadd.xlane.f32.xlu0 %v1295
  %v1297 = vpop.xlane.xlu0 %1296
  %v1298 = vsel %vm92, %v1286, 0.0
  %1299 = vadd.xlane.f32.xlu0 %v1298
  %v1300 = vpop.xlane.xlu0 %1299
  %v1301 = vsel %vm92, %v1287, 0.0
  %1302 = vadd.xlane.f32.xlu0 %v1301
  %v1303 = vpop.xlane.xlu0 %1302
  %v1304 = vsel %vm92, %v1288, 0.0
  %1305 = vadd.xlane.f32.xlu0 %v1304
  %v1306 = vpop.xlane.xlu0 %1305
  %v1307 = vsel %vm92, %v1289, 0.0
  %1308 = vadd.xlane.f32.xlu0 %v1307
  %v1309 = vpop.xlane.xlu0 %1308
  %v1310 = vsel %vm92, %v1290, 0.0
  %1311 = vadd.xlane.f32.xlu0 %v1310
  %v1312 = vpop.xlane.xlu0 %1311
  %v1313 = vsel %vm92, %v1291, 0.0
  %1314 = vadd.xlane.f32.xlu0 %v1313
  %v1315 = vpop.xlane.xlu0 %1314
  %v1316 = vld [vmem:[%s1] sm:$0xff]
  %v1317 = vld [vmem:[%s1 + $0x8] sm:$0xff]
  %v1318 = vld [vmem:[%s1 + $0x10] sm:$0xff]
  %v1319 = vld [vmem:[%s1 + $0x18] sm:$0xff]
  %v1320 = vld [vmem:[%s1 + $0x20] sm:$0xff]
  %v1321 = vld [vmem:[%s1 + $0x28] sm:$0xff]
  %v1322 = vld [vmem:[%s1 + $0x30] sm:$0xff]
  %v1323 = vld [vmem:[%s1 + $0x38] sm:$0xff]
  %vm1324 = vcmp.gt.f32.partialorder %v1316, 0.0
  %vm1325 = vcmp.gt.f32.partialorder %v1317, 0.0
  %vm1326 = vcmp.gt.f32.partialorder %v1318, 0.0
  %vm1327 = vcmp.gt.f32.partialorder %v1319, 0.0
  %vm1328 = vcmp.gt.f32.partialorder %v1320, 0.0
  %vm1329 = vcmp.gt.f32.partialorder %v1321, 0.0
  %vm1330 = vcmp.gt.f32.partialorder %v1322, 0.0
  %vm1331 = vcmp.gt.f32.partialorder %v1323, 0.0
  %v1332 = vsel %vm1324, %v1294, -1e+09
  %v1333 = vsel %vm1325, %v1297, -1e+09
  %v1334 = vsel %vm1326, %v1300, -1e+09
  %v1335 = vsel %vm1327, %v1303, -1e+09
  %v1336 = vsel %vm1328, %v1306, -1e+09
  %v1337 = vsel %vm1329, %v1309, -1e+09
  %v1338 = vsel %vm1330, %v1312, -1e+09
  %v1339 = vsel %vm1331, %v1315, -1e+09
  %vm1340 = vcmask 7168
  %v1341 = vsel %vm1340, %v1332, -inf
  %v1342 = vsel %vm1340, %v1333, -inf
  %v1343 = vsel %vm1340, %v1334, -inf
  %v1344 = vsel %vm1340, %v1335, -inf
  %v1345 = vsel %vm1340, %v1336, -inf
  %v1346 = vmax.f32 %v1341, %v1345
  %v1347 = vsel %vm1340, %v1337, -inf
  %v1348 = vmax.f32 %v1342, %v1347
  %v1349 = vsel %vm1340, %v1338, -inf
  %v1350 = vmax.f32 %v1343, %v1349
  %v1351 = vsel %vm1340, %v1339, -inf
  %v1352 = vmax.f32 %v1344, %v1351
  %v1353 = vmax.f32 %v1346, %v1348
  %v1354 = vmax.f32 %v1350, %v1352
  %v1355 = vmax.f32 %v1353, %v1354
  %v1356 = vsub.f32 %v1332, %v1355
  %v1357 = vsub.f32 %v1333, %v1355
  %v1358 = vsub.f32 %v1334, %v1355
  %v1359 = vsub.f32 %v1335, %v1355
  %v1360 = vsub.f32 %v1336, %v1355
  %v1361 = vsub.f32 %v1337, %v1355
  %v1362 = vsub.f32 %v1338, %v1355
  %v1363 = vsub.f32 %v1339, %v1355
  %v1364 = vmul.f32 %v1356, 1.442695
  %v1365 = vpow.pop %v1364
  %v1366 = vmul.f32 %v1357, 1.442695
  %v1367 = vpow.pop %v1366
  %v1368 = vmul.f32 %v1358, 1.442695
  %v1369 = vpow.pop %v1368
  %v1370 = vmul.f32 %v1359, 1.442695
  %v1371 = vpow.pop %v1370
  %v1372 = vmul.f32 %v1360, 1.442695
  %v1373 = vpow.pop %v1372
  %v1374 = vmul.f32 %v1361, 1.442695
  %v1375 = vpow.pop %v1374
  %v1376 = vmul.f32 %v1362, 1.442695
  %v1377 = vpow.pop %v1376
  %v1378 = vmul.f32 %v1363, 1.442695
  %v1379 = vpow.pop %v1378
  %v1380 = vmul.f32 %v1365, %v1316
  %v1381 = vmul.f32 %v1367, %v1317
  %v1382 = vmul.f32 %v1369, %v1318
  %v1383 = vmul.f32 %v1371, %v1319
  %v1384 = vmul.f32 %v1373, %v1320
  %v1385 = vmul.f32 %v1375, %v1321
  %v1386 = vmul.f32 %v1377, %v1322
  %v1387 = vmul.f32 %v1379, %v1323
  %v1388 = vsel %vm1340, %v1380, 0.0
  %v1389 = vsel %vm1340, %v1381, 0.0
  %v1390 = vadd.f32 %v1388, %v1389
  %v1391 = vsel %vm1340, %v1382, 0.0
  %v1392 = vadd.f32 %v1390, %v1391
  %v1393 = vsel %vm1340, %v1383, 0.0
  %v1394 = vadd.f32 %v1392, %v1393
  %v1395 = vsel %vm1340, %v1384, 0.0
  %v1396 = vadd.f32 %v1394, %v1395
  %v1397 = vsel %vm1340, %v1385, 0.0
  %v1398 = vadd.f32 %v1396, %v1397
  %v1399 = vsel %vm1340, %v1386, 0.0
  %v1400 = vadd.f32 %v1398, %v1399
  %v1401 = vsel %vm1340, %v1387, 0.0
  %v1402 = vadd.f32 %v1400, %v1401
  %v1403 = vadd.f32 %v1402, 1e-09
  %v1404 = vrcp.pop %v1403
  %v1405 = vmul.f32 %v1380, %v1404
  %v1406 = vmul.f32 %v1381, %v1404
  %v1407 = vmul.f32 %v1382, %v1404
  %v1408 = vmul.f32 %v1383, %v1404
  %v1409 = vmul.f32 %v1384, %v1404
  %v1410 = vmul.f32 %v1385, %v1404
  %v1411 = vmul.f32 %v1386, %v1404
  %v1412 = vmul.f32 %v1387, %v1404
  %1414 = vset.pattern.permute.xlu0 0
  %1415 = vperm.xlu0 %1414, %v1405
  %v1416 = vpop.permute.xlu0 %1415
  %1419 = vset.pattern.permute.xlu0 0
  %1420 = vperm.xlu0 %1419, %v1406
  %v1421 = vpop.permute.xlu0 %1420
  %1424 = vset.pattern.permute.xlu0 0
  %1425 = vperm.xlu0 %1424, %v1407
  %v1426 = vpop.permute.xlu0 %1425
  %1429 = vset.pattern.permute.xlu0 0
  %1430 = vperm.xlu0 %1429, %v1408
  %v1431 = vpop.permute.xlu0 %1430
  %1434 = vset.pattern.permute.xlu0 0
  %1435 = vperm.xlu0 %1434, %v1409
  %v1436 = vpop.permute.xlu0 %1435
  %1439 = vset.pattern.permute.xlu0 0
  %1440 = vperm.xlu0 %1439, %v1410
  %v1441 = vpop.permute.xlu0 %1440
  %1444 = vset.pattern.permute.xlu0 0
  %1445 = vperm.xlu0 %1444, %v1411
  %v1446 = vpop.permute.xlu0 %1445
  %1449 = vset.pattern.permute.xlu0 0
  %1450 = vperm.xlu0 %1449, %v1412
  %v1451 = vpop.permute.xlu0 %1450
  %v1453 = vmul.f32 %v1416, %v1080
  %v1454 = vmul.f32 %v1421, %v1081
  %v1455 = vmul.f32 %v1426, %v1082
  %v1456 = vmul.f32 %v1431, %v1083
  %v1457 = vmul.f32 %v1436, %v1084
  %v1458 = vmul.f32 %v1441, %v1085
  %v1459 = vmul.f32 %v1446, %v1086
  %v1460 = vmul.f32 %v1451, %v1087
  %v1461 = vsel %vm92, %v1453, 0.0
  %v1462 = vsel %vm92, %v1454, 0.0
  %v1463 = vadd.f32 %v1461, %v1462
  %v1464 = vsel %vm92, %v1455, 0.0
  %v1465 = vadd.f32 %v1463, %v1464
  %v1466 = vsel %vm92, %v1456, 0.0
  %v1467 = vadd.f32 %v1465, %v1466
  %v1468 = vsel %vm92, %v1457, 0.0
  %v1469 = vadd.f32 %v1467, %v1468
  %v1470 = vsel %vm92, %v1458, 0.0
  %v1471 = vadd.f32 %v1469, %v1470
  %v1472 = vsel %vm92, %v1459, 0.0
  %v1473 = vadd.f32 %v1471, %v1472
  %v1474 = vsel %vm92, %v1460, 0.0
  %v1475 = vadd.f32 %v1473, %v1474
  %v1476 = vld [vmem:[%s9] sm:$0xf]
  %v1477 = vld [vmem:[%s9 + $0x4] sm:$0xf]
  %v1478 = vpack.c.bf16 %v1475, %v1475
  %v1479 = vld [vmem:[%s10] sm:$0xf]
  %v1480 = vld [vmem:[%s10 + $0x4] sm:$0xf]
  %v1481 = vld [vmem:[%s10 + $0x8] sm:$0xf]
  %v1482 = vld [vmem:[%s10 + $0xc] sm:$0xf]
  %v1487 = vunpack.c.l.b16 %v1479
  %v1488 = vunpack.c.l.b16 %v1480
  %v1489 = vunpack.c.l.b16 %v1481
  %v1490 = vunpack.c.l.b16 %v1482
  %v1491 = vpack.c.b16 %v1488, %v1487
  %v1492 = vpack.c.b16 %v1490, %v1489
  %v1496 = vsel %vm92, %v1478, 0
  %1498 = vmatprep.subr.bf16.mxu0 0
  %1499 = vmatpush1.bf16.msra.mxu0 %v1491
  %1500 = vmatprep.subr.bf16.mxu0 0
  %1501 = vmatpush1.bf16.msra.mxu0 %v1492
  %1502 = vmatprep.subr.bf16.mxu0 0
  %1503 = vmatpush1.bf16.msra.mxu0 0
  %1504 = vmatprep.subr.bf16.mxu0 0
  %1505 = vmatpush1.bf16.msra.mxu0 0
  %1506 = vmatprep.subr.bf16.mxu0 0
  %1507 = vmatpush1.bf16.msra.mxu0 0
  %1508 = vmatprep.subr.bf16.mxu0 0
  %1509 = vmatpush1.bf16.msra.mxu0 0
  %1510 = vmatprep.subr.bf16.mxu0 0
  %1511 = vmatpush1.bf16.msra.mxu0 0
  %1512 = vmatprep.subr.bf16.mxu0 0
  %1513 = vmatpush1.bf16.msra.mxu0 0
  %1514 = vmatprep.subr.bf16.mxu0 0
  %1515 = vmatpush1.bf16.msra.mxu0 0
  %1516 = vmatprep.subr.bf16.mxu0 0
  %1517 = vmatpush1.bf16.msra.mxu0 0
  %1518 = vmatprep.subr.bf16.mxu0 0
  %1519 = vmatpush1.bf16.msra.mxu0 0
  %1520 = vmatprep.subr.bf16.mxu0 0
  %1521 = vmatpush1.bf16.msra.mxu0 0
  %1522 = vmatprep.subr.bf16.mxu0 0
  %1523 = vmatpush1.bf16.msra.mxu0 0
  %1524 = vmatprep.subr.bf16.mxu0 0
  %1525 = vmatpush1.bf16.msra.mxu0 0
  %1526 = vmatprep.subr.bf16.mxu0 0
  %1527 = vmatpush1.bf16.msra.mxu0 0
  %1528 = vmatprep.subr.bf16.mxu0 0
  %1529 = vmatpush1.bf16.msra.mxu0 0
  %1530 = vmatprep.mubr.bf16.mxu0 0
  %1531 = vmatmul.mubr.bf16.gmra.mrb[0].mxu0 %v1496
  %v1532 = vpop.f32.mrb[0].mxu0
  %v1533 = vadd.f32 0.0, %v1532
  %v1534 = vpop.f32.mrb[0].mxu0
  %v1535 = vpop.f32.mrb[0].mxu0
  %v1536 = vpop.f32.mrb[0].mxu0
  %1537 = vdwg.mxu0
  %v1540 = vunpack.c.l.b16 %v1476
  %v1541 = vunpack.c.l.b16 %v1477
  %v1542 = vpack.c.b16 %v1541, %v1540
  %1544 = vmatprep.subr.bf16.mxu0 0
  %1545 = vmatpush1.bf16.msra.mxu0 %v1542
  %1546 = vmatprep.subr.bf16.mxu0 0
  %1547 = vmatpush1.bf16.msra.mxu0 0
  %1548 = vmatprep.subr.bf16.mxu0 0
  %1549 = vmatpush1.bf16.msra.mxu0 0
  %1550 = vmatprep.subr.bf16.mxu0 0
  %1551 = vmatpush1.bf16.msra.mxu0 0
  %1552 = vmatprep.subr.bf16.mxu0 0
  %1553 = vmatpush1.bf16.msra.mxu0 0
  %1554 = vmatprep.subr.bf16.mxu0 0
  %1555 = vmatpush1.bf16.msra.mxu0 0
  %1556 = vmatprep.subr.bf16.mxu0 0
  %1557 = vmatpush1.bf16.msra.mxu0 0
  %1558 = vmatprep.subr.bf16.mxu0 0
  %1559 = vmatpush1.bf16.msra.mxu0 0
  %1560 = vmatprep.subr.bf16.mxu0 0
  %1561 = vmatpush1.bf16.msra.mxu0 0
  %1562 = vmatprep.subr.bf16.mxu0 0
  %1563 = vmatpush1.bf16.msra.mxu0 0
  %1564 = vmatprep.subr.bf16.mxu0 0
  %1565 = vmatpush1.bf16.msra.mxu0 0
  %1566 = vmatprep.subr.bf16.mxu0 0
  %1567 = vmatpush1.bf16.msra.mxu0 0
  %1568 = vmatprep.subr.bf16.mxu0 0
  %1569 = vmatpush1.bf16.msra.mxu0 0
  %1570 = vmatprep.subr.bf16.mxu0 0
  %1571 = vmatpush1.bf16.msra.mxu0 0
  %1572 = vmatprep.subr.bf16.mxu0 0
  %1573 = vmatpush1.bf16.msra.mxu0 0
  %1574 = vmatprep.subr.bf16.mxu0 0
  %1575 = vmatpush1.bf16.msra.mxu0 0
  %1576 = vmatprep.mubr.bf16.mxu0 0
  %1577 = vmatmul.mubr.bf16.gmra.mrb[0].mxu0 %v1219
  %v1578 = vpop.f32.mrb[0].mxu0
  %v1579 = vadd.f32 %v1533, %v1578
  %v1580 = vpop.f32.mrb[0].mxu0
  %v1581 = vpop.f32.mrb[0].mxu0
  %v1582 = vpop.f32.mrb[0].mxu0
  %1583 = vdwg.mxu0
  %v1584 = vld [vmem:[%s11] sm:$0x1]
  %v1586 = vlaneseq
  %v1587 = vshrl.u32 %v1586, 7
  %v1588 = vsub.s32 0, %v1587
  %v1589 = vrot.slane %v1584, %v1588
  %v1591 = vadd.f32 %v1579, %v1589
  %1593 = vrot.lane.b32.xlu0 %v1591, 32
  %v1594 = vpop.permute.xlu0 %1593
  %v1596 = vadd.f32 %v1180, %v1594
  %v1597 = vadd.f32 %v1183, %v1594
  %v1598 = vadd.f32 %v1188, %v1594
  %v1599 = vadd.f32 %v1191, %v1594
  %v1600 = vadd.f32 %v1196, %v1594
  %v1601 = vadd.f32 %v1199, %v1594
  %v1602 = vadd.f32 %v1204, %v1594
  %v1603 = vadd.f32 %v1207, %v1594
  %v1604 = vtanh.pop %v1596
  %v1605 = vtanh.pop %v1597
  %v1606 = vtanh.pop %v1598
  %v1607 = vtanh.pop %v1599
  %v1608 = vtanh.pop %v1600
  %v1609 = vtanh.pop %v1601
  %v1610 = vtanh.pop %v1602
  %v1611 = vtanh.pop %v1603
  %v1612 = vpack.c.bf16 %v1604, %v1604
  %v1613 = vpack.c.bf16 %v1605, %v1605
  %v1614 = vpack.c.bf16 %v1606, %v1606
  %v1615 = vpack.c.bf16 %v1607, %v1607
  %v1616 = vpack.c.bf16 %v1608, %v1608
  %v1617 = vpack.c.bf16 %v1609, %v1609
  %v1618 = vpack.c.bf16 %v1610, %v1610
  %v1619 = vpack.c.bf16 %v1611, %v1611
  %v1620 = vld [vmem:[%s12] sm:$0xf]
  %v1621 = vld [vmem:[%s12 + $0x4] sm:$0xf]
  %v1622 = vld [vmem:[%s12 + $0x8] sm:$0xf]
  %v1623 = vld [vmem:[%s12 + $0xc] sm:$0xf]
  %v1632 = vunpack.c.l.b16 %v1612
  %v1633 = vunpack.c.l.b16 %v1613
  %v1634 = vunpack.c.l.b16 %v1614
  %v1635 = vunpack.c.l.b16 %v1615
  %v1636 = vunpack.c.l.b16 %v1616
  %v1637 = vunpack.c.l.b16 %v1617
  %v1638 = vunpack.c.l.b16 %v1618
  %v1639 = vunpack.c.l.b16 %v1619
  %v1640 = vpack.c.b16 %v1633, %v1632
  %v1641 = vpack.c.b16 %v1635, %v1634
  %v1642 = vpack.c.b16 %v1637, %v1636
  %v1643 = vpack.c.b16 %v1639, %v1638
  %1644 = vrot.lane.b32.xlu0 %v1640, 96
  %v1645 = vpop.permute.xlu0 %1644
  %1646 = vrot.lane.b32.xlu0 %v1641, 96
  %v1647 = vpop.permute.xlu0 %1646
  %1648 = vrot.lane.b32.xlu0 %v1642, 96
  %v1649 = vpop.permute.xlu0 %1648
  %1650 = vrot.lane.b32.xlu0 %v1643, 96
  %v1651 = vpop.permute.xlu0 %1650
  %v1656 = vunpack.c.l.b16 %v1620
  %v1657 = vunpack.c.l.b16 %v1621
  %v1658 = vunpack.c.l.b16 %v1622
  %v1659 = vunpack.c.l.b16 %v1623
  %v1660 = vpack.c.b16 %v1657, %v1656
  %v1661 = vpack.c.b16 %v1659, %v1658
  %v1665 = vsel %vm92, %v1645, 0
  %v1668 = vsel %vm92, %v1647, 0
  %v1671 = vsel %vm92, %v1649, 0
  %v1674 = vsel %vm92, %v1651, 0
  %1676 = vmatprep.subr.bf16.mxu0 0
  %1677 = vmatpush1.bf16.msra.mxu0 %v1660
  %1678 = vmatprep.subr.bf16.mxu0 0
  %1679 = vmatpush1.bf16.msra.mxu0 %v1661
  %1680 = vmatprep.subr.bf16.mxu0 0
  %1681 = vmatpush1.bf16.msra.mxu0 0
  %1682 = vmatprep.subr.bf16.mxu0 0
  %1683 = vmatpush1.bf16.msra.mxu0 0
  %1684 = vmatprep.subr.bf16.mxu0 0
  %1685 = vmatpush1.bf16.msra.mxu0 0
  %1686 = vmatprep.subr.bf16.mxu0 0
  %1687 = vmatpush1.bf16.msra.mxu0 0
  %1688 = vmatprep.subr.bf16.mxu0 0
  %1689 = vmatpush1.bf16.msra.mxu0 0
  %1690 = vmatprep.subr.bf16.mxu0 0
  %1691 = vmatpush1.bf16.msra.mxu0 0
  %1692 = vmatprep.subr.bf16.mxu0 0
  %1693 = vmatpush1.bf16.msra.mxu0 0
  %1694 = vmatprep.subr.bf16.mxu0 0
  %1695 = vmatpush1.bf16.msra.mxu0 0
  %1696 = vmatprep.subr.bf16.mxu0 0
  %1697 = vmatpush1.bf16.msra.mxu0 0
  %1698 = vmatprep.subr.bf16.mxu0 0
  %1699 = vmatpush1.bf16.msra.mxu0 0
  %1700 = vmatprep.subr.bf16.mxu0 0
  %1701 = vmatpush1.bf16.msra.mxu0 0
  %1702 = vmatprep.subr.bf16.mxu0 0
  %1703 = vmatpush1.bf16.msra.mxu0 0
  %1704 = vmatprep.subr.bf16.mxu0 0
  %1705 = vmatpush1.bf16.msra.mxu0 0
  %1706 = vmatprep.subr.bf16.mxu0 0
  %1707 = vmatpush1.bf16.msra.mxu0 0
  %1708 = vmatprep.mubr.bf16.mxu0 0
  %1709 = vmatmul.mubr.bf16.gmra.mrb[0].mxu0 %v1665
  %v1710 = vpop.f32.mrb[0].mxu0
  %v1711 = vadd.f32 0.0, %v1710
  %v1712 = vpop.f32.mrb[0].mxu0
  %v1713 = vpop.f32.mrb[0].mxu0
  %v1714 = vadd.f32 0.0, %v1713
  %v1715 = vpop.f32.mrb[0].mxu0
  %1716 = vmatprep.mubr.bf16.mxu0 0
  %1717 = vmatmul.mubr.bf16.gmra.mrb[0].mxu0 %v1668
  %v1718 = vpop.f32.mrb[0].mxu0
  %v1719 = vadd.f32 0.0, %v1718
  %v1720 = vpop.f32.mrb[0].mxu0
  %v1721 = vpop.f32.mrb[0].mxu0
  %v1722 = vadd.f32 0.0, %v1721
  %v1723 = vpop.f32.mrb[0].mxu0
  %1724 = vmatprep.mubr.bf16.mxu0 0
  %1725 = vmatmul.mubr.bf16.gmra.mrb[0].mxu0 %v1671
  %v1726 = vpop.f32.mrb[0].mxu0
  %v1727 = vadd.f32 0.0, %v1726
  %v1728 = vpop.f32.mrb[0].mxu0
  %v1729 = vpop.f32.mrb[0].mxu0
  %v1730 = vadd.f32 0.0, %v1729
  %v1731 = vpop.f32.mrb[0].mxu0
  %1732 = vmatprep.mubr.bf16.mxu0 0
  %1733 = vmatmul.mubr.bf16.gmra.mrb[0].mxu0 %v1674
  %v1734 = vpop.f32.mrb[0].mxu0
  %v1735 = vadd.f32 0.0, %v1734
  %v1736 = vpop.f32.mrb[0].mxu0
  %v1737 = vpop.f32.mrb[0].mxu0
  %v1738 = vadd.f32 0.0, %v1737
  %v1739 = vpop.f32.mrb[0].mxu0
  %1740 = vdwg.mxu0
  %v1741 = vld [vmem:[%s13] sm:$0x1]
  %v1743 = vlaneseq
  %v1744 = vshrl.u32 %v1743, 7
  %v1745 = vsub.s32 0, %v1744
  %v1746 = vrot.slane %v1741, %v1745
  %v1748 = vadd.f32 %v1711, %v1746
  %v1749 = vadd.f32 %v1714, %v1746
  %v1750 = vadd.f32 %v1719, %v1746
  %v1751 = vadd.f32 %v1722, %v1746
  %v1752 = vadd.f32 %v1727, %v1746
  %v1753 = vadd.f32 %v1730, %v1746
  %v1754 = vadd.f32 %v1735, %v1746
  %v1755 = vadd.f32 %v1738, %v1746
  %1756 = vst [vmem:[%s14] sm:$0xff] %v1748
  %1757 = vst [vmem:[%s14 + $0x8] sm:$0xff] %v1749
  %1758 = vst [vmem:[%s14 + $0x10] sm:$0xff] %v1750
  %1759 = vst [vmem:[%s14 + $0x18] sm:$0xff] %v1751
  %1760 = vst [vmem:[%s14 + $0x20] sm:$0xff] %v1752
  %1761 = vst [vmem:[%s14 + $0x28] sm:$0xff] %v1753
  %1762 = vst [vmem:[%s14 + $0x30] sm:$0xff] %v1754
  %1763 = vst [vmem:[%s14 + $0x38] sm:$0xff] %v1755
  // Predicated region
  $region58: #{rel_based_labeling_forward.1} parent=0 // pred_check
    _
  $region59: #{rel_based_labeling_forward.1} parent=0 // pred_check_branch
    %1765 = sbr.rel (0) target = $region61
  $region60: #{rel_based_labeling_forward.1} parent=0 // pred_region
    _
  $region61: #{rel_based_labeling_forward.1} parent=0 // pred_fallthru
    _
  // Predicated region
  $region62: #{rel_based_labeling_forward.1} parent=0 // pred_check
    _
  $region63: #{rel_based_labeling_forward.1} parent=0 // pred_check_branch
    %1767 = sbr.rel (0) target = $region65
  $region64: #{rel_based_labeling_forward.1} parent=0 // pred_region
    _
  $region65: #{rel_based_labeling_forward.1} parent=0 // pred_fallthru
    _

</llo_original>
